<compile_context>
chip_gen: v6e
topology: v6e:2x2x1
jax: 0.10.0
libtpu: 0.0.40
codegen_flags: <defaults>
</compile_context>

<pallas_src>
import functools

import jax
import jax.numpy as jnp
from jax.experimental import pallas as pl
from jax.experimental.pallas import tpu as pltpu

_BF16 = jnp.bfloat16
_F32 = jnp.float32


# --------------------------------------------------------------------------
# Fused forward kernel
# --------------------------------------------------------------------------

def _fused_forward_kernel(
        # inputs
        x_ref, at_ref,
        w1_ref, gcn_b_ref, gat_b_ref,
        gcn_mulv_w_ref, gcn_mulv_b_ref,
        gat_mulv_w_ref, gat_mulv_b_ref,
        # outputs
        adj_ref, mulv_ref,
        *, heads, h1, h2):
    """Entire GCN+GAT VGAE forward; all intermediates live in VMEM/vregs."""
    at_bf = at_ref[...]            # (N, N) bf16 0/1; at[i, j] = 1 iff edge j -> i (self loops incl.)
    edge_mask = at_bf > 0          # reused by all three GAT layers (no resident f32 bias buffer)
    x_bf = x_ref[...].astype(_BF16)

    # GCN sym-normalization folded as row scales (a_norm never materialized):
    #   a_norm @ h == dinv * (A_hat @ (dinv * h))
    deg = jnp.sum(at_bf.astype(_F32), axis=1, keepdims=True)        # (N, 1) in-degree incl. self loop
    dinv = jax.lax.rsqrt(jnp.maximum(deg, 1e-12))                   # deg >= 1 (self loops present)

    def gcn_agg(h):                                                  # h: (N, C) f32
        hs = (dinv * h).astype(_BF16)
        return dinv * jnp.dot(at_bf, hs, preferred_element_type=_F32)

    def gat_heads(hfeat, scores, fout, concat):
        """One GATConv attention stage.
        hfeat: (N, heads*fout) f32; scores: (N, 2*heads) f32,
        columns [src_0..src_{H-1}, dst_0..dst_{H-1}]."""
        hfeat_bf = hfeat.astype(_BF16)
        scores_t = jnp.transpose(scores)                             # (2*heads, N): once per layer
        outs = []                                                    # concat: 3 tiny (N, fout) tiles
        acc = None                                                   # mean: running accumulator
        for h in range(heads):                                       # static unroll (heads == 3)
            # e[i, j] = dst_score_i + src_score_j   (edge j -> i)
            e = scores[:, heads + h:heads + h + 1] + scores_t[h:h + 1, :]
            e = jnp.where(e > 0, e, jnp.float32(0.2) * e)            # LeakyReLU(0.2)
            e = jnp.where(edge_mask, e, jnp.float32(-1e9))           # mask non-edges (select, no bias buf)
            p = jnp.exp(e - jnp.max(e, axis=-1, keepdims=True))
            alpha = p * pl.reciprocal(jnp.sum(p, axis=-1, keepdims=True), approx=True)
            o = jnp.dot(alpha.astype(_BF16), hfeat_bf[:, h * fout:(h + 1) * fout],
                        preferred_element_type=_F32)
            if concat:
                outs.append(o)
            else:
                acc = o if acc is None else acc + o                  # per-head temps die each iter
        if concat:
            return jnp.concatenate(outs, axis=-1)                    # one lane-dense (N, heads*fout)
        return acc * jnp.float32(1.0 / heads)

    nh1 = heads * h1
    nh2 = heads * h2

    # ---- layer 1: ONE matmul covers gcn_w, gat_w and the GAT attention scores ----
    proj1 = jnp.dot(x_bf, w1_ref[...].astype(_BF16), preferred_element_type=_F32)
    h_gcn = jnp.maximum(gcn_agg(proj1[:, :h1]) + gcn_b_ref[...], 0.0)
    h_gat = jnp.maximum(
        gat_heads(proj1[:, h1:h1 + nh1], proj1[:, h1 + nh1:], h1, concat=True)
        + gat_b_ref[...], 0.0)

    # ---- GCN mu / logvar: one projection matmul + one aggregation matmul for both ----
    proj_gcn = jnp.dot(h_gcn.astype(_BF16), gcn_mulv_w_ref[...].astype(_BF16),
                       preferred_element_type=_F32)                  # (N, 2*h2)
    mulv_gcn = gcn_agg(proj_gcn) + gcn_mulv_b_ref[...]
    mu_gcn, lv_gcn = mulv_gcn[:, :h2], mulv_gcn[:, h2:]

    # ---- GAT mu / logvar: one matmul gives both head-feature slabs and both score sets ----
    proj_gat = jnp.dot(h_gat.astype(_BF16), gat_mulv_w_ref[...].astype(_BF16),
                       preferred_element_type=_F32)                  # (N, 2*nh2 + 4*heads)
    mu_gat = gat_heads(proj_gat[:, :nh2],
                       proj_gat[:, 2 * nh2:2 * nh2 + 2 * heads],
                       h2, concat=False) + gat_mulv_b_ref[:, :h2]
    lv_gat = gat_heads(proj_gat[:, nh2:2 * nh2],
                       proj_gat[:, 2 * nh2 + 2 * heads:],
                       h2, concat=False) + gat_mulv_b_ref[:, h2:]

    # ---- reparametrize (eval mode: z = mu) + inner-product decoder ----
    z = jnp.maximum(mu_gcn, mu_gat)                 # computed once; reused for decoder + mu output
    z_bf = z.astype(_BF16)
    logits = jax.lax.dot_general(z_bf, z_bf, (((1,), (1,)), ((), ())),
                                 preferred_element_type=_F32)        # z @ z.T on the MXU (trans_b)
    adj_ref[...] = jax.nn.sigmoid(logits)
    mulv_ref[...] = jnp.concatenate([z, jnp.maximum(lv_gcn, lv_gat)], axis=-1)


# --------------------------------------------------------------------------
# Wrapper
# --------------------------------------------------------------------------

def _att_block_diag(a_src, a_dst):
    """Block-diagonal (heads*fout, 2*heads) matrix so per-head attention-score
    reductions become part of the feature matmul (W_aug = [W | W @ a_cat])."""
    heads, fout = a_src.shape
    acat = jnp.zeros((heads * fout, 2 * heads), jnp.float32)
    for h in range(heads):
        acat = acat.at[h * fout:(h + 1) * fout, h].set(a_src[h])
        acat = acat.at[h * fout:(h + 1) * fout, heads + h].set(a_dst[h])
    return acat


def gcn_gat_vgae_forward(x, edge_index, params, *, hidden_dim1, hidden_dim2,
                         num_heads):
    n = x.shape[0]
    h1, h2, heads = hidden_dim1, hidden_dim2, num_heads
    src, dst = edge_index[0], edge_index[1]

    # Transposed dense adjacency built directly (no O(N^2) transpose), with self
    # loops, passed to the kernel in bf16 (values are exactly 0/1; halves the
    # dominant DMA and its VMEM residency).
    a_hat_t = jnp.zeros((n, n), jnp.float32).at[dst, src].set(1.0)
    a_hat_t = jnp.maximum(a_hat_t, jnp.eye(n, dtype=jnp.float32)).astype(jnp.bfloat16)

    # Host-side weight packing (all tiny, one-time).
    acat = _att_block_diag(params["gat_asrc"], params["gat_adst"])
    acat_mu = _att_block_diag(params["gat_mu_asrc"], params["gat_mu_adst"])
    acat_lv = _att_block_diag(params["gat_lv_asrc"], params["gat_lv_adst"])
    # layer 1: [gcn_w | gat_w | gat_w @ a_cat]
    w1 = jnp.concatenate([params["gcn_w"], params["gat_w"],
                          params["gat_w"] @ acat], axis=1)
    # gcn mu‖logvar fused
    gcn_mulv_w = jnp.concatenate([params["gcn_mu_w"], params["gcn_lv_w"]], axis=1)
    gcn_mulv_b = jnp.concatenate([params["gcn_mu_b"], params["gcn_lv_b"]], axis=1)
    # gat mu‖logvar fused, with their score projections folded in
    gat_mulv_w = jnp.concatenate([params["gat_mu_w"], params["gat_lv_w"],
                                  params["gat_mu_w"] @ acat_mu,
                                  params["gat_lv_w"] @ acat_lv], axis=1)
    gat_mulv_b = jnp.concatenate([params["gat_mu_b"], params["gat_lv_b"]], axis=1)

    out_shape = (jax.ShapeDtypeStruct((n, n), jnp.float32),
                 jax.ShapeDtypeStruct((n, 2 * h2), jnp.float32))

    vmem = pl.BlockSpec(memory_space=pltpu.MemorySpace.VMEM)
    adj_rec, mulv = pl.pallas_call(
        functools.partial(_fused_forward_kernel, heads=heads, h1=h1, h2=h2),
        out_shape=out_shape,
        in_specs=[vmem] * 9,
        out_specs=(vmem, vmem),
    )(x, a_hat_t, w1, params["gcn_b"], params["gat_b"],
      gcn_mulv_w, gcn_mulv_b, gat_mulv_w, gat_mulv_b)

    return adj_rec, mulv[:, :h2], mulv[:, h2:]


# --------------------------------------------------------------------------
# Parameters
# --------------------------------------------------------------------------

def _glorot(key, shape):
    fan_in, fan_out = shape[0], shape[-1]
    s = jnp.sqrt(6.0 / (fan_in + fan_out))
    return jax.random.uniform(key, shape, jnp.float32, -s, s)


def init_params(key, input_feat_dim, hidden_dim1, hidden_dim2, num_heads):
    ks = jax.random.split(key, 12)
    return {
        # GCN branch
        "gcn_w": _glorot(ks[0], (input_feat_dim, hidden_dim1)),
        "gcn_b": jnp.zeros((1, hidden_dim1), jnp.float32),
        "gcn_mu_w": _glorot(ks[1], (hidden_dim1, hidden_dim2)),
        "gcn_mu_b": jnp.zeros((1, hidden_dim2), jnp.float32),
        "gcn_lv_w": _glorot(ks[2], (hidden_dim1, hidden_dim2)),
        "gcn_lv_b": jnp.zeros((1, hidden_dim2), jnp.float32),
        # GAT branch (layer 1: concat heads)
        "gat_w": _glorot(ks[3], (input_feat_dim, num_heads * hidden_dim1)),
        "gat_asrc": _glorot(ks[4], (num_heads, hidden_dim1)),
        "gat_adst": _glorot(ks[5], (num_heads, hidden_dim1)),
        "gat_b": jnp.zeros((1, num_heads * hidden_dim1), jnp.float32),
        # GAT mu / logvar (mean over heads)
        "gat_mu_w": _glorot(ks[6], (num_heads * hidden_dim1, num_heads * hidden_dim2)),
        "gat_mu_asrc": _glorot(ks[7], (num_heads, hidden_dim2)),
        "gat_mu_adst": _glorot(ks[8], (num_heads, hidden_dim2)),
        "gat_mu_b": jnp.zeros((1, hidden_dim2), jnp.float32),
        "gat_lv_w": _glorot(ks[9], (num_heads * hidden_dim1, num_heads * hidden_dim2)),
        "gat_lv_asrc": _glorot(ks[10], (num_heads, hidden_dim2)),
        "gat_lv_adst": _glorot(ks[11], (num_heads, hidden_dim2)),
        "gat_lv_b": jnp.zeros((1, hidden_dim2), jnp.float32),
    }


# --------------------------------------------------------------------------
# Main
# --------------------------------------------------------------------------

if __name__ == "__main__":
    N = 16              # number of graph nodes
    IN_DIM = 8          # input_feat_dim
    H1 = 16             # hidden_dim1
    H2 = 8              # hidden_dim2
    HEADS = 3           # num_heads

    key = jax.random.PRNGKey(0)
    k_x, k_p = jax.random.split(key)

    # deterministic node features
    x = jax.random.normal(k_x, (N, IN_DIM), jnp.float32)

    # deterministic undirected ring + chord graph (no self loops in edge_index)
    src = jnp.arange(N, dtype=jnp.int32)
    ring_dst = (src + 1) % N
    chord_dst = (src + 5) % N
    srcs = jnp.concatenate([src, ring_dst, src, chord_dst])
    dsts = jnp.concatenate([ring_dst, src, chord_dst, src])
    edge_index = jnp.stack([srcs, dsts], axis=0)             # (2, E)

    params = init_params(k_p, IN_DIM, H1, H2, HEADS)

    fwd = jax.jit(functools.partial(gcn_gat_vgae_forward,
                                    hidden_dim1=H1, hidden_dim2=H2,
                                    num_heads=HEADS))
    adj_rec, mu_max, logvar_max = fwd(x, edge_index, params)

    jax.block_until_ready((adj_rec, mu_max, logvar_max))
    assert adj_rec.shape == (N, N)
    assert mu_max.shape == (N, H2)
    assert logvar_max.shape == (N, H2)
    print("KERNEL_OK")
</pallas_src>

<mosaic_0001>
module attributes {stable_mosaic.version = 11 : i64} {
  func.func @_fused_forward_kernel(%arg0: memref<16x8xf32, #tpu.memory_space<vmem>>, %arg1: memref<16x16xbf16, #tpu.memory_space<vmem>>, %arg2: memref<8x70xf32, #tpu.memory_space<vmem>>, %arg3: memref<1x16xf32, #tpu.memory_space<vmem>>, %arg4: memref<1x48xf32, #tpu.memory_space<vmem>>, %arg5: memref<16x16xf32, #tpu.memory_space<vmem>>, %arg6: memref<1x16xf32, #tpu.memory_space<vmem>>, %arg7: memref<48x60xf32, #tpu.memory_space<vmem>>, %arg8: memref<1x16xf32, #tpu.memory_space<vmem>>, %arg9: memref<16x16xf32, #tpu.memory_space<vmem>>, %arg10: memref<16x16xf32, #tpu.memory_space<vmem>>) attributes {dimension_semantics = [], scalar_prefetch = 0 : i64, scratch_operands = 0 : i64, tpu.core_type = #tpu.core_type<tc>} {
    %c0 = arith.constant 0 : index
    %c0_0 = arith.constant 0 : index
    %0 = vector.load %arg1[%c0, %c0_0] : memref<16x16xbf16, #tpu.memory_space<vmem>>, vector<16x16xbf16>
    %cst = arith.constant 0.000000e+00 : bf16
    %1 = vector.broadcast %cst : bf16 to vector<16x16xbf16>
    %2 = arith.cmpf ogt, %0, %1 : vector<16x16xbf16>
    %c0_1 = arith.constant 0 : index
    %c0_2 = arith.constant 0 : index
    %3 = vector.load %arg0[%c0_1, %c0_2] : memref<16x8xf32, #tpu.memory_space<vmem>>, vector<16x8xf32>
    %4 = arith.truncf %3 : vector<16x8xf32> to vector<16x8xbf16>
    %5 = arith.extf %0 : vector<16x16xbf16> to vector<16x16xf32>
    %cst_3 = arith.constant dense<0.000000e+00> : vector<16xf32>
    %6 = vector.multi_reduction <add>, %5, %cst_3 [1] : vector<16x16xf32> to vector<16xf32>
    %7 = vector.shape_cast %6 : vector<16xf32> to vector<16x1xf32>
    %cst_4 = arith.constant 9.99999996E-13 : f32
    %8 = vector.broadcast %cst_4 : f32 to vector<16x1xf32>
    %9 = arith.maximumf %7, %8 : vector<16x1xf32>
    %10 = math.rsqrt %9 : vector<16x1xf32>
    %c0_5 = arith.constant 0 : index
    %c0_6 = arith.constant 0 : index
    %11 = vector.load %arg2[%c0_5, %c0_6] : memref<8x70xf32, #tpu.memory_space<vmem>>, vector<8x70xf32>
    %12 = arith.truncf %11 : vector<8x70xf32> to vector<8x70xbf16>
    %cst_7 = arith.constant dense<0.000000e+00> : vector<16x70xf32>
    %13 = tpu.matmul %4, %12, %cst_7 {dimension_numbers = #tpu.dot_dimension_numbers<[1], [0], [0], [1], [0, 0, 1, 1], [], []>} : vector<16x8xbf16>, vector<8x70xbf16>, vector<16x70xf32> -> vector<16x70xf32>
    %14 = vector.extract_strided_slice %13 {offsets = [0, 0], sizes = [16, 16], strides = [1, 1]} : vector<16x70xf32> to vector<16x16xf32>
    %15 = vector.broadcast %10 : vector<16x1xf32> to vector<16x16xf32>
    %16 = arith.mulf %15, %14 : vector<16x16xf32>
    %17 = arith.truncf %16 : vector<16x16xf32> to vector<16x16xbf16>
    %cst_8 = arith.constant dense<0.000000e+00> : vector<16x16xf32>
    %18 = tpu.matmul %0, %17, %cst_8 {dimension_numbers = #tpu.dot_dimension_numbers<[1], [0], [0], [1], [0, 0, 1, 1], [], []>} : vector<16x16xbf16>, vector<16x16xbf16>, vector<16x16xf32> -> vector<16x16xf32>
    %19 = vector.broadcast %10 : vector<16x1xf32> to vector<16x16xf32>
    %20 = arith.mulf %19, %18 : vector<16x16xf32>
    %c0_9 = arith.constant 0 : index
    %c0_10 = arith.constant 0 : index
    %21 = vector.load %arg3[%c0_9, %c0_10] : memref<1x16xf32, #tpu.memory_space<vmem>>, vector<1x16xf32>
    %22 = vector.broadcast %21 : vector<1x16xf32> to vector<16x16xf32>
    %23 = arith.addf %20, %22 : vector<16x16xf32>
    %cst_11 = arith.constant 0.000000e+00 : f32
    %24 = vector.broadcast %cst_11 : f32 to vector<16x16xf32>
    %25 = arith.maximumf %23, %24 : vector<16x16xf32>
    %26 = vector.extract_strided_slice %13 {offsets = [0, 16], sizes = [16, 48], strides = [1, 1]} : vector<16x70xf32> to vector<16x48xf32>
    %27 = vector.extract_strided_slice %13 {offsets = [0, 64], sizes = [16, 6], strides = [1, 1]} : vector<16x70xf32> to vector<16x6xf32>
    %28 = arith.truncf %26 : vector<16x48xf32> to vector<16x48xbf16>
    %29 = tpu.transpose %27, [1, 0] : vector<16x6xf32> -> vector<6x16xf32>
    %30 = vector.extract_strided_slice %27 {offsets = [0, 3], sizes = [16, 1], strides = [1, 1]} : vector<16x6xf32> to vector<16x1xf32>
    %31 = vector.extract_strided_slice %29 {offsets = [0, 0], sizes = [1, 16], strides = [1, 1]} : vector<6x16xf32> to vector<1x16xf32>
    %32 = vector.broadcast %30 : vector<16x1xf32> to vector<16x16xf32>
    %33 = vector.broadcast %31 : vector<1x16xf32> to vector<16x16xf32>
    %34 = arith.addf %32, %33 : vector<16x16xf32>
    %cst_12 = arith.constant 0.000000e+00 : f32
    %35 = vector.broadcast %cst_12 : f32 to vector<16x16xf32>
    %36 = arith.cmpf ogt, %34, %35 : vector<16x16xf32>
    %cst_13 = arith.constant 2.000000e-01 : f32
    %37 = vector.broadcast %cst_13 : f32 to vector<16x16xf32>
    %38 = arith.mulf %37, %34 : vector<16x16xf32>
    %39 = arith.select %36, %34, %38 : vector<16x16xi1>, vector<16x16xf32>
    %cst_14 = arith.constant -1.000000e+09 : f32
    %40 = vector.broadcast %cst_14 : f32 to vector<16x16xf32>
    %41 = arith.select %2, %39, %40 : vector<16x16xi1>, vector<16x16xf32>
    %cst_15 = arith.constant dense<0xFF800000> : vector<16xf32>
    %42 = vector.multi_reduction <maximumf>, %41, %cst_15 [1] : vector<16x16xf32> to vector<16xf32>
    %43 = vector.shape_cast %42 : vector<16xf32> to vector<16x1xf32>
    %44 = vector.broadcast %43 : vector<16x1xf32> to vector<16x16xf32>
    %45 = arith.subf %41, %44 : vector<16x16xf32>
    %46 = math.exp %45 : vector<16x16xf32>
    %cst_16 = arith.constant dense<0.000000e+00> : vector<16xf32>
    %47 = vector.multi_reduction <add>, %46, %cst_16 [1] : vector<16x16xf32> to vector<16xf32>
    %48 = vector.shape_cast %47 : vector<16xf32> to vector<16x1xf32>
    %49 = tpu.reciprocal %48 {approx = true} : vector<16x1xf32> -> vector<16x1xf32>
    %50 = vector.broadcast %49 : vector<16x1xf32> to vector<16x16xf32>
    %51 = arith.mulf %46, %50 : vector<16x16xf32>
    %52 = arith.truncf %51 : vector<16x16xf32> to vector<16x16xbf16>
    %53 = vector.extract_strided_slice %28 {offsets = [0, 0], sizes = [16, 16], strides = [1, 1]} : vector<16x48xbf16> to vector<16x16xbf16>
    %cst_17 = arith.constant dense<0.000000e+00> : vector<16x16xf32>
    %54 = tpu.matmul %52, %53, %cst_17 {dimension_numbers = #tpu.dot_dimension_numbers<[1], [0], [0], [1], [0, 0, 1, 1], [], []>} : vector<16x16xbf16>, vector<16x16xbf16>, vector<16x16xf32> -> vector<16x16xf32>
    %55 = vector.extract_strided_slice %27 {offsets = [0, 4], sizes = [16, 1], strides = [1, 1]} : vector<16x6xf32> to vector<16x1xf32>
    %56 = vector.extract_strided_slice %29 {offsets = [1, 0], sizes = [1, 16], strides = [1, 1]} : vector<6x16xf32> to vector<1x16xf32>
    %57 = vector.broadcast %55 : vector<16x1xf32> to vector<16x16xf32>
    %58 = vector.broadcast %56 : vector<1x16xf32> to vector<16x16xf32>
    %59 = arith.addf %57, %58 : vector<16x16xf32>
    %cst_18 = arith.constant 0.000000e+00 : f32
    %60 = vector.broadcast %cst_18 : f32 to vector<16x16xf32>
    %61 = arith.cmpf ogt, %59, %60 : vector<16x16xf32>
    %cst_19 = arith.constant 2.000000e-01 : f32
    %62 = vector.broadcast %cst_19 : f32 to vector<16x16xf32>
    %63 = arith.mulf %62, %59 : vector<16x16xf32>
    %64 = arith.select %61, %59, %63 : vector<16x16xi1>, vector<16x16xf32>
    %cst_20 = arith.constant -1.000000e+09 : f32
    %65 = vector.broadcast %cst_20 : f32 to vector<16x16xf32>
    %66 = arith.select %2, %64, %65 : vector<16x16xi1>, vector<16x16xf32>
    %cst_21 = arith.constant dense<0xFF800000> : vector<16xf32>
    %67 = vector.multi_reduction <maximumf>, %66, %cst_21 [1] : vector<16x16xf32> to vector<16xf32>
    %68 = vector.shape_cast %67 : vector<16xf32> to vector<16x1xf32>
    %69 = vector.broadcast %68 : vector<16x1xf32> to vector<16x16xf32>
    %70 = arith.subf %66, %69 : vector<16x16xf32>
    %71 = math.exp %70 : vector<16x16xf32>
    %cst_22 = arith.constant dense<0.000000e+00> : vector<16xf32>
    %72 = vector.multi_reduction <add>, %71, %cst_22 [1] : vector<16x16xf32> to vector<16xf32>
    %73 = vector.shape_cast %72 : vector<16xf32> to vector<16x1xf32>
    %74 = tpu.reciprocal %73 {approx = true} : vector<16x1xf32> -> vector<16x1xf32>
    %75 = vector.broadcast %74 : vector<16x1xf32> to vector<16x16xf32>
    %76 = arith.mulf %71, %75 : vector<16x16xf32>
    %77 = arith.truncf %76 : vector<16x16xf32> to vector<16x16xbf16>
    %78 = vector.extract_strided_slice %28 {offsets = [0, 16], sizes = [16, 16], strides = [1, 1]} : vector<16x48xbf16> to vector<16x16xbf16>
    %cst_23 = arith.constant dense<0.000000e+00> : vector<16x16xf32>
    %79 = tpu.matmul %77, %78, %cst_23 {dimension_numbers = #tpu.dot_dimension_numbers<[1], [0], [0], [1], [0, 0, 1, 1], [], []>} : vector<16x16xbf16>, vector<16x16xbf16>, vector<16x16xf32> -> vector<16x16xf32>
    %80 = vector.extract_strided_slice %27 {offsets = [0, 5], sizes = [16, 1], strides = [1, 1]} : vector<16x6xf32> to vector<16x1xf32>
    %81 = vector.extract_strided_slice %29 {offsets = [2, 0], sizes = [1, 16], strides = [1, 1]} : vector<6x16xf32> to vector<1x16xf32>
    %82 = vector.broadcast %80 : vector<16x1xf32> to vector<16x16xf32>
    %83 = vector.broadcast %81 : vector<1x16xf32> to vector<16x16xf32>
    %84 = arith.addf %82, %83 : vector<16x16xf32>
    %cst_24 = arith.constant 0.000000e+00 : f32
    %85 = vector.broadcast %cst_24 : f32 to vector<16x16xf32>
    %86 = arith.cmpf ogt, %84, %85 : vector<16x16xf32>
    %cst_25 = arith.constant 2.000000e-01 : f32
    %87 = vector.broadcast %cst_25 : f32 to vector<16x16xf32>
    %88 = arith.mulf %87, %84 : vector<16x16xf32>
    %89 = arith.select %86, %84, %88 : vector<16x16xi1>, vector<16x16xf32>
    %cst_26 = arith.constant -1.000000e+09 : f32
    %90 = vector.broadcast %cst_26 : f32 to vector<16x16xf32>
    %91 = arith.select %2, %89, %90 : vector<16x16xi1>, vector<16x16xf32>
    %cst_27 = arith.constant dense<0xFF800000> : vector<16xf32>
    %92 = vector.multi_reduction <maximumf>, %91, %cst_27 [1] : vector<16x16xf32> to vector<16xf32>
    %93 = vector.shape_cast %92 : vector<16xf32> to vector<16x1xf32>
    %94 = vector.broadcast %93 : vector<16x1xf32> to vector<16x16xf32>
    %95 = arith.subf %91, %94 : vector<16x16xf32>
    %96 = math.exp %95 : vector<16x16xf32>
    %cst_28 = arith.constant dense<0.000000e+00> : vector<16xf32>
    %97 = vector.multi_reduction <add>, %96, %cst_28 [1] : vector<16x16xf32> to vector<16xf32>
    %98 = vector.shape_cast %97 : vector<16xf32> to vector<16x1xf32>
    %99 = tpu.reciprocal %98 {approx = true} : vector<16x1xf32> -> vector<16x1xf32>
    %100 = vector.broadcast %99 : vector<16x1xf32> to vector<16x16xf32>
    %101 = arith.mulf %96, %100 : vector<16x16xf32>
    %102 = arith.truncf %101 : vector<16x16xf32> to vector<16x16xbf16>
    %103 = vector.extract_strided_slice %28 {offsets = [0, 32], sizes = [16, 16], strides = [1, 1]} : vector<16x48xbf16> to vector<16x16xbf16>
    %cst_29 = arith.constant dense<0.000000e+00> : vector<16x16xf32>
    %104 = tpu.matmul %102, %103, %cst_29 {dimension_numbers = #tpu.dot_dimension_numbers<[1], [0], [0], [1], [0, 0, 1, 1], [], []>} : vector<16x16xbf16>, vector<16x16xbf16>, vector<16x16xf32> -> vector<16x16xf32>
    %105 = tpu.concatenate %54, %79, %104 in 1 : vector<16x16xf32>, vector<16x16xf32>, vector<16x16xf32> -> vector<16x48xf32>
    %c0_30 = arith.constant 0 : index
    %c0_31 = arith.constant 0 : index
    %106 = vector.load %arg4[%c0_30, %c0_31] : memref<1x48xf32, #tpu.memory_space<vmem>>, vector<1x48xf32>
    %107 = vector.broadcast %106 : vector<1x48xf32> to vector<16x48xf32>
    %108 = arith.addf %105, %107 : vector<16x48xf32>
    %cst_32 = arith.constant 0.000000e+00 : f32
    %109 = vector.broadcast %cst_32 : f32 to vector<16x48xf32>
    %110 = arith.maximumf %108, %109 : vector<16x48xf32>
    %111 = arith.truncf %25 : vector<16x16xf32> to vector<16x16xbf16>
    %c0_33 = arith.constant 0 : index
    %c0_34 = arith.constant 0 : index
    %112 = vector.load %arg5[%c0_33, %c0_34] : memref<16x16xf32, #tpu.memory_space<vmem>>, vector<16x16xf32>
    %113 = arith.truncf %112 : vector<16x16xf32> to vector<16x16xbf16>
    %cst_35 = arith.constant dense<0.000000e+00> : vector<16x16xf32>
    %114 = tpu.matmul %111, %113, %cst_35 {dimension_numbers = #tpu.dot_dimension_numbers<[1], [0], [0], [1], [0, 0, 1, 1], [], []>} : vector<16x16xbf16>, vector<16x16xbf16>, vector<16x16xf32> -> vector<16x16xf32>
    %115 = vector.broadcast %10 : vector<16x1xf32> to vector<16x16xf32>
    %116 = arith.mulf %115, %114 : vector<16x16xf32>
    %117 = arith.truncf %116 : vector<16x16xf32> to vector<16x16xbf16>
    %cst_36 = arith.constant dense<0.000000e+00> : vector<16x16xf32>
    %118 = tpu.matmul %0, %117, %cst_36 {dimension_numbers = #tpu.dot_dimension_numbers<[1], [0], [0], [1], [0, 0, 1, 1], [], []>} : vector<16x16xbf16>, vector<16x16xbf16>, vector<16x16xf32> -> vector<16x16xf32>
    %119 = vector.broadcast %10 : vector<16x1xf32> to vector<16x16xf32>
    %120 = arith.mulf %119, %118 : vector<16x16xf32>
    %c0_37 = arith.constant 0 : index
    %c0_38 = arith.constant 0 : index
    %121 = vector.load %arg6[%c0_37, %c0_38] : memref<1x16xf32, #tpu.memory_space<vmem>>, vector<1x16xf32>
    %122 = vector.broadcast %121 : vector<1x16xf32> to vector<16x16xf32>
    %123 = arith.addf %120, %122 : vector<16x16xf32>
    %124 = vector.extract_strided_slice %123 {offsets = [0, 0], sizes = [16, 8], strides = [1, 1]} : vector<16x16xf32> to vector<16x8xf32>
    %125 = vector.extract_strided_slice %123 {offsets = [0, 8], sizes = [16, 8], strides = [1, 1]} : vector<16x16xf32> to vector<16x8xf32>
    %126 = arith.truncf %110 : vector<16x48xf32> to vector<16x48xbf16>
    %c0_39 = arith.constant 0 : index
    %c0_40 = arith.constant 0 : index
    %127 = vector.load %arg7[%c0_39, %c0_40] : memref<48x60xf32, #tpu.memory_space<vmem>>, vector<48x60xf32>
    %128 = arith.truncf %127 : vector<48x60xf32> to vector<48x60xbf16>
    %cst_41 = arith.constant dense<0.000000e+00> : vector<16x60xf32>
    %129 = tpu.matmul %126, %128, %cst_41 {dimension_numbers = #tpu.dot_dimension_numbers<[1], [0], [0], [1], [0, 0, 1, 1], [], []>} : vector<16x48xbf16>, vector<48x60xbf16>, vector<16x60xf32> -> vector<16x60xf32>
    %130 = vector.extract_strided_slice %129 {offsets = [0, 0], sizes = [16, 24], strides = [1, 1]} : vector<16x60xf32> to vector<16x24xf32>
    %131 = vector.extract_strided_slice %129 {offsets = [0, 48], sizes = [16, 6], strides = [1, 1]} : vector<16x60xf32> to vector<16x6xf32>
    %132 = arith.truncf %130 : vector<16x24xf32> to vector<16x24xbf16>
    %133 = tpu.transpose %131, [1, 0] : vector<16x6xf32> -> vector<6x16xf32>
    %134 = vector.extract_strided_slice %131 {offsets = [0, 3], sizes = [16, 1], strides = [1, 1]} : vector<16x6xf32> to vector<16x1xf32>
    %135 = vector.extract_strided_slice %133 {offsets = [0, 0], sizes = [1, 16], strides = [1, 1]} : vector<6x16xf32> to vector<1x16xf32>
    %136 = vector.broadcast %134 : vector<16x1xf32> to vector<16x16xf32>
    %137 = vector.broadcast %135 : vector<1x16xf32> to vector<16x16xf32>
    %138 = arith.addf %136, %137 : vector<16x16xf32>
    %cst_42 = arith.constant 0.000000e+00 : f32
    %139 = vector.broadcast %cst_42 : f32 to vector<16x16xf32>
    %140 = arith.cmpf ogt, %138, %139 : vector<16x16xf32>
    %cst_43 = arith.constant 2.000000e-01 : f32
    %141 = vector.broadcast %cst_43 : f32 to vector<16x16xf32>
    %142 = arith.mulf %141, %138 : vector<16x16xf32>
    %143 = arith.select %140, %138, %142 : vector<16x16xi1>, vector<16x16xf32>
    %cst_44 = arith.constant -1.000000e+09 : f32
    %144 = vector.broadcast %cst_44 : f32 to vector<16x16xf32>
    %145 = arith.select %2, %143, %144 : vector<16x16xi1>, vector<16x16xf32>
    %cst_45 = arith.constant dense<0xFF800000> : vector<16xf32>
    %146 = vector.multi_reduction <maximumf>, %145, %cst_45 [1] : vector<16x16xf32> to vector<16xf32>
    %147 = vector.shape_cast %146 : vector<16xf32> to vector<16x1xf32>
    %148 = vector.broadcast %147 : vector<16x1xf32> to vector<16x16xf32>
    %149 = arith.subf %145, %148 : vector<16x16xf32>
    %150 = math.exp %149 : vector<16x16xf32>
    %cst_46 = arith.constant dense<0.000000e+00> : vector<16xf32>
    %151 = vector.multi_reduction <add>, %150, %cst_46 [1] : vector<16x16xf32> to vector<16xf32>
    %152 = vector.shape_cast %151 : vector<16xf32> to vector<16x1xf32>
    %153 = tpu.reciprocal %152 {approx = true} : vector<16x1xf32> -> vector<16x1xf32>
    %154 = vector.broadcast %153 : vector<16x1xf32> to vector<16x16xf32>
    %155 = arith.mulf %150, %154 : vector<16x16xf32>
    %156 = arith.truncf %155 : vector<16x16xf32> to vector<16x16xbf16>
    %157 = vector.extract_strided_slice %132 {offsets = [0, 0], sizes = [16, 8], strides = [1, 1]} : vector<16x24xbf16> to vector<16x8xbf16>
    %cst_47 = arith.constant dense<0.000000e+00> : vector<16x8xf32>
    %158 = tpu.matmul %156, %157, %cst_47 {dimension_numbers = #tpu.dot_dimension_numbers<[1], [0], [0], [1], [0, 0, 1, 1], [], []>} : vector<16x16xbf16>, vector<16x8xbf16>, vector<16x8xf32> -> vector<16x8xf32>
    %159 = vector.extract_strided_slice %131 {offsets = [0, 4], sizes = [16, 1], strides = [1, 1]} : vector<16x6xf32> to vector<16x1xf32>
    %160 = vector.extract_strided_slice %133 {offsets = [1, 0], sizes = [1, 16], strides = [1, 1]} : vector<6x16xf32> to vector<1x16xf32>
    %161 = vector.broadcast %159 : vector<16x1xf32> to vector<16x16xf32>
    %162 = vector.broadcast %160 : vector<1x16xf32> to vector<16x16xf32>
    %163 = arith.addf %161, %162 : vector<16x16xf32>
    %cst_48 = arith.constant 0.000000e+00 : f32
    %164 = vector.broadcast %cst_48 : f32 to vector<16x16xf32>
    %165 = arith.cmpf ogt, %163, %164 : vector<16x16xf32>
    %cst_49 = arith.constant 2.000000e-01 : f32
    %166 = vector.broadcast %cst_49 : f32 to vector<16x16xf32>
    %167 = arith.mulf %166, %163 : vector<16x16xf32>
    %168 = arith.select %165, %163, %167 : vector<16x16xi1>, vector<16x16xf32>
    %cst_50 = arith.constant -1.000000e+09 : f32
    %169 = vector.broadcast %cst_50 : f32 to vector<16x16xf32>
    %170 = arith.select %2, %168, %169 : vector<16x16xi1>, vector<16x16xf32>
    %cst_51 = arith.constant dense<0xFF800000> : vector<16xf32>
    %171 = vector.multi_reduction <maximumf>, %170, %cst_51 [1] : vector<16x16xf32> to vector<16xf32>
    %172 = vector.shape_cast %171 : vector<16xf32> to vector<16x1xf32>
    %173 = vector.broadcast %172 : vector<16x1xf32> to vector<16x16xf32>
    %174 = arith.subf %170, %173 : vector<16x16xf32>
    %175 = math.exp %174 : vector<16x16xf32>
    %cst_52 = arith.constant dense<0.000000e+00> : vector<16xf32>
    %176 = vector.multi_reduction <add>, %175, %cst_52 [1] : vector<16x16xf32> to vector<16xf32>
    %177 = vector.shape_cast %176 : vector<16xf32> to vector<16x1xf32>
    %178 = tpu.reciprocal %177 {approx = true} : vector<16x1xf32> -> vector<16x1xf32>
    %179 = vector.broadcast %178 : vector<16x1xf32> to vector<16x16xf32>
    %180 = arith.mulf %175, %179 : vector<16x16xf32>
    %181 = arith.truncf %180 : vector<16x16xf32> to vector<16x16xbf16>
    %182 = vector.extract_strided_slice %132 {offsets = [0, 8], sizes = [16, 8], strides = [1, 1]} : vector<16x24xbf16> to vector<16x8xbf16>
    %cst_53 = arith.constant dense<0.000000e+00> : vector<16x8xf32>
    %183 = tpu.matmul %181, %182, %cst_53 {dimension_numbers = #tpu.dot_dimension_numbers<[1], [0], [0], [1], [0, 0, 1, 1], [], []>} : vector<16x16xbf16>, vector<16x8xbf16>, vector<16x8xf32> -> vector<16x8xf32>
    %184 = arith.addf %158, %183 : vector<16x8xf32>
    %185 = vector.extract_strided_slice %131 {offsets = [0, 5], sizes = [16, 1], strides = [1, 1]} : vector<16x6xf32> to vector<16x1xf32>
    %186 = vector.extract_strided_slice %133 {offsets = [2, 0], sizes = [1, 16], strides = [1, 1]} : vector<6x16xf32> to vector<1x16xf32>
    %187 = vector.broadcast %185 : vector<16x1xf32> to vector<16x16xf32>
    %188 = vector.broadcast %186 : vector<1x16xf32> to vector<16x16xf32>
    %189 = arith.addf %187, %188 : vector<16x16xf32>
    %cst_54 = arith.constant 0.000000e+00 : f32
    %190 = vector.broadcast %cst_54 : f32 to vector<16x16xf32>
    %191 = arith.cmpf ogt, %189, %190 : vector<16x16xf32>
    %cst_55 = arith.constant 2.000000e-01 : f32
    %192 = vector.broadcast %cst_55 : f32 to vector<16x16xf32>
    %193 = arith.mulf %192, %189 : vector<16x16xf32>
    %194 = arith.select %191, %189, %193 : vector<16x16xi1>, vector<16x16xf32>
    %cst_56 = arith.constant -1.000000e+09 : f32
    %195 = vector.broadcast %cst_56 : f32 to vector<16x16xf32>
    %196 = arith.select %2, %194, %195 : vector<16x16xi1>, vector<16x16xf32>
    %cst_57 = arith.constant dense<0xFF800000> : vector<16xf32>
    %197 = vector.multi_reduction <maximumf>, %196, %cst_57 [1] : vector<16x16xf32> to vector<16xf32>
    %198 = vector.shape_cast %197 : vector<16xf32> to vector<16x1xf32>
    %199 = vector.broadcast %198 : vector<16x1xf32> to vector<16x16xf32>
    %200 = arith.subf %196, %199 : vector<16x16xf32>
    %201 = math.exp %200 : vector<16x16xf32>
    %cst_58 = arith.constant dense<0.000000e+00> : vector<16xf32>
    %202 = vector.multi_reduction <add>, %201, %cst_58 [1] : vector<16x16xf32> to vector<16xf32>
    %203 = vector.shape_cast %202 : vector<16xf32> to vector<16x1xf32>
    %204 = tpu.reciprocal %203 {approx = true} : vector<16x1xf32> -> vector<16x1xf32>
    %205 = vector.broadcast %204 : vector<16x1xf32> to vector<16x16xf32>
    %206 = arith.mulf %201, %205 : vector<16x16xf32>
    %207 = arith.truncf %206 : vector<16x16xf32> to vector<16x16xbf16>
    %208 = vector.extract_strided_slice %132 {offsets = [0, 16], sizes = [16, 8], strides = [1, 1]} : vector<16x24xbf16> to vector<16x8xbf16>
    %cst_59 = arith.constant dense<0.000000e+00> : vector<16x8xf32>
    %209 = tpu.matmul %207, %208, %cst_59 {dimension_numbers = #tpu.dot_dimension_numbers<[1], [0], [0], [1], [0, 0, 1, 1], [], []>} : vector<16x16xbf16>, vector<16x8xbf16>, vector<16x8xf32> -> vector<16x8xf32>
    %210 = arith.addf %184, %209 : vector<16x8xf32>
    %cst_60 = arith.constant 0.333333343 : f32
    %211 = vector.broadcast %cst_60 : f32 to vector<16x8xf32>
    %212 = arith.mulf %210, %211 : vector<16x8xf32>
    %c0_61 = arith.constant 0 : index
    %c0_62 = arith.constant 0 : index
    %213 = vector.load %arg8[%c0_61, %c0_62] : memref<1x16xf32, #tpu.memory_space<vmem>>, vector<1x8xf32>
    %214 = vector.broadcast %213 : vector<1x8xf32> to vector<16x8xf32>
    %215 = arith.addf %212, %214 : vector<16x8xf32>
    %216 = vector.extract_strided_slice %129 {offsets = [0, 24], sizes = [16, 24], strides = [1, 1]} : vector<16x60xf32> to vector<16x24xf32>
    %217 = vector.extract_strided_slice %129 {offsets = [0, 54], sizes = [16, 6], strides = [1, 1]} : vector<16x60xf32> to vector<16x6xf32>
    %218 = arith.truncf %216 : vector<16x24xf32> to vector<16x24xbf16>
    %219 = tpu.transpose %217, [1, 0] : vector<16x6xf32> -> vector<6x16xf32>
    %220 = vector.extract_strided_slice %217 {offsets = [0, 3], sizes = [16, 1], strides = [1, 1]} : vector<16x6xf32> to vector<16x1xf32>
    %221 = vector.extract_strided_slice %219 {offsets = [0, 0], sizes = [1, 16], strides = [1, 1]} : vector<6x16xf32> to vector<1x16xf32>
    %222 = vector.broadcast %220 : vector<16x1xf32> to vector<16x16xf32>
    %223 = vector.broadcast %221 : vector<1x16xf32> to vector<16x16xf32>
    %224 = arith.addf %222, %223 : vector<16x16xf32>
    %cst_63 = arith.constant 0.000000e+00 : f32
    %225 = vector.broadcast %cst_63 : f32 to vector<16x16xf32>
    %226 = arith.cmpf ogt, %224, %225 : vector<16x16xf32>
    %cst_64 = arith.constant 2.000000e-01 : f32
    %227 = vector.broadcast %cst_64 : f32 to vector<16x16xf32>
    %228 = arith.mulf %227, %224 : vector<16x16xf32>
    %229 = arith.select %226, %224, %228 : vector<16x16xi1>, vector<16x16xf32>
    %cst_65 = arith.constant -1.000000e+09 : f32
    %230 = vector.broadcast %cst_65 : f32 to vector<16x16xf32>
    %231 = arith.select %2, %229, %230 : vector<16x16xi1>, vector<16x16xf32>
    %cst_66 = arith.constant dense<0xFF800000> : vector<16xf32>
    %232 = vector.multi_reduction <maximumf>, %231, %cst_66 [1] : vector<16x16xf32> to vector<16xf32>
    %233 = vector.shape_cast %232 : vector<16xf32> to vector<16x1xf32>
    %234 = vector.broadcast %233 : vector<16x1xf32> to vector<16x16xf32>
    %235 = arith.subf %231, %234 : vector<16x16xf32>
    %236 = math.exp %235 : vector<16x16xf32>
    %cst_67 = arith.constant dense<0.000000e+00> : vector<16xf32>
    %237 = vector.multi_reduction <add>, %236, %cst_67 [1] : vector<16x16xf32> to vector<16xf32>
    %238 = vector.shape_cast %237 : vector<16xf32> to vector<16x1xf32>
    %239 = tpu.reciprocal %238 {approx = true} : vector<16x1xf32> -> vector<16x1xf32>
    %240 = vector.broadcast %239 : vector<16x1xf32> to vector<16x16xf32>
    %241 = arith.mulf %236, %240 : vector<16x16xf32>
    %242 = arith.truncf %241 : vector<16x16xf32> to vector<16x16xbf16>
    %243 = vector.extract_strided_slice %218 {offsets = [0, 0], sizes = [16, 8], strides = [1, 1]} : vector<16x24xbf16> to vector<16x8xbf16>
    %cst_68 = arith.constant dense<0.000000e+00> : vector<16x8xf32>
    %244 = tpu.matmul %242, %243, %cst_68 {dimension_numbers = #tpu.dot_dimension_numbers<[1], [0], [0], [1], [0, 0, 1, 1], [], []>} : vector<16x16xbf16>, vector<16x8xbf16>, vector<16x8xf32> -> vector<16x8xf32>
    %245 = vector.extract_strided_slice %217 {offsets = [0, 4], sizes = [16, 1], strides = [1, 1]} : vector<16x6xf32> to vector<16x1xf32>
    %246 = vector.extract_strided_slice %219 {offsets = [1, 0], sizes = [1, 16], strides = [1, 1]} : vector<6x16xf32> to vector<1x16xf32>
    %247 = vector.broadcast %245 : vector<16x1xf32> to vector<16x16xf32>
    %248 = vector.broadcast %246 : vector<1x16xf32> to vector<16x16xf32>
    %249 = arith.addf %247, %248 : vector<16x16xf32>
    %cst_69 = arith.constant 0.000000e+00 : f32
    %250 = vector.broadcast %cst_69 : f32 to vector<16x16xf32>
    %251 = arith.cmpf ogt, %249, %250 : vector<16x16xf32>
    %cst_70 = arith.constant 2.000000e-01 : f32
    %252 = vector.broadcast %cst_70 : f32 to vector<16x16xf32>
    %253 = arith.mulf %252, %249 : vector<16x16xf32>
    %254 = arith.select %251, %249, %253 : vector<16x16xi1>, vector<16x16xf32>
    %cst_71 = arith.constant -1.000000e+09 : f32
    %255 = vector.broadcast %cst_71 : f32 to vector<16x16xf32>
    %256 = arith.select %2, %254, %255 : vector<16x16xi1>, vector<16x16xf32>
    %cst_72 = arith.constant dense<0xFF800000> : vector<16xf32>
    %257 = vector.multi_reduction <maximumf>, %256, %cst_72 [1] : vector<16x16xf32> to vector<16xf32>
    %258 = vector.shape_cast %257 : vector<16xf32> to vector<16x1xf32>
    %259 = vector.broadcast %258 : vector<16x1xf32> to vector<16x16xf32>
    %260 = arith.subf %256, %259 : vector<16x16xf32>
    %261 = math.exp %260 : vector<16x16xf32>
    %cst_73 = arith.constant dense<0.000000e+00> : vector<16xf32>
    %262 = vector.multi_reduction <add>, %261, %cst_73 [1] : vector<16x16xf32> to vector<16xf32>
    %263 = vector.shape_cast %262 : vector<16xf32> to vector<16x1xf32>
    %264 = tpu.reciprocal %263 {approx = true} : vector<16x1xf32> -> vector<16x1xf32>
    %265 = vector.broadcast %264 : vector<16x1xf32> to vector<16x16xf32>
    %266 = arith.mulf %261, %265 : vector<16x16xf32>
    %267 = arith.truncf %266 : vector<16x16xf32> to vector<16x16xbf16>
    %268 = vector.extract_strided_slice %218 {offsets = [0, 8], sizes = [16, 8], strides = [1, 1]} : vector<16x24xbf16> to vector<16x8xbf16>
    %cst_74 = arith.constant dense<0.000000e+00> : vector<16x8xf32>
    %269 = tpu.matmul %267, %268, %cst_74 {dimension_numbers = #tpu.dot_dimension_numbers<[1], [0], [0], [1], [0, 0, 1, 1], [], []>} : vector<16x16xbf16>, vector<16x8xbf16>, vector<16x8xf32> -> vector<16x8xf32>
    %270 = arith.addf %244, %269 : vector<16x8xf32>
    %271 = vector.extract_strided_slice %217 {offsets = [0, 5], sizes = [16, 1], strides = [1, 1]} : vector<16x6xf32> to vector<16x1xf32>
    %272 = vector.extract_strided_slice %219 {offsets = [2, 0], sizes = [1, 16], strides = [1, 1]} : vector<6x16xf32> to vector<1x16xf32>
    %273 = vector.broadcast %271 : vector<16x1xf32> to vector<16x16xf32>
    %274 = vector.broadcast %272 : vector<1x16xf32> to vector<16x16xf32>
    %275 = arith.addf %273, %274 : vector<16x16xf32>
    %cst_75 = arith.constant 0.000000e+00 : f32
    %276 = vector.broadcast %cst_75 : f32 to vector<16x16xf32>
    %277 = arith.cmpf ogt, %275, %276 : vector<16x16xf32>
    %cst_76 = arith.constant 2.000000e-01 : f32
    %278 = vector.broadcast %cst_76 : f32 to vector<16x16xf32>
    %279 = arith.mulf %278, %275 : vector<16x16xf32>
    %280 = arith.select %277, %275, %279 : vector<16x16xi1>, vector<16x16xf32>
    %cst_77 = arith.constant -1.000000e+09 : f32
    %281 = vector.broadcast %cst_77 : f32 to vector<16x16xf32>
    %282 = arith.select %2, %280, %281 : vector<16x16xi1>, vector<16x16xf32>
    %cst_78 = arith.constant dense<0xFF800000> : vector<16xf32>
    %283 = vector.multi_reduction <maximumf>, %282, %cst_78 [1] : vector<16x16xf32> to vector<16xf32>
    %284 = vector.shape_cast %283 : vector<16xf32> to vector<16x1xf32>
    %285 = vector.broadcast %284 : vector<16x1xf32> to vector<16x16xf32>
    %286 = arith.subf %282, %285 : vector<16x16xf32>
    %287 = math.exp %286 : vector<16x16xf32>
    %cst_79 = arith.constant dense<0.000000e+00> : vector<16xf32>
    %288 = vector.multi_reduction <add>, %287, %cst_79 [1] : vector<16x16xf32> to vector<16xf32>
    %289 = vector.shape_cast %288 : vector<16xf32> to vector<16x1xf32>
    %290 = tpu.reciprocal %289 {approx = true} : vector<16x1xf32> -> vector<16x1xf32>
    %291 = vector.broadcast %290 : vector<16x1xf32> to vector<16x16xf32>
    %292 = arith.mulf %287, %291 : vector<16x16xf32>
    %293 = arith.truncf %292 : vector<16x16xf32> to vector<16x16xbf16>
    %294 = vector.extract_strided_slice %218 {offsets = [0, 16], sizes = [16, 8], strides = [1, 1]} : vector<16x24xbf16> to vector<16x8xbf16>
    %cst_80 = arith.constant dense<0.000000e+00> : vector<16x8xf32>
    %295 = tpu.matmul %293, %294, %cst_80 {dimension_numbers = #tpu.dot_dimension_numbers<[1], [0], [0], [1], [0, 0, 1, 1], [], []>} : vector<16x16xbf16>, vector<16x8xbf16>, vector<16x8xf32> -> vector<16x8xf32>
    %296 = arith.addf %270, %295 : vector<16x8xf32>
    %cst_81 = arith.constant 0.333333343 : f32
    %297 = vector.broadcast %cst_81 : f32 to vector<16x8xf32>
    %298 = arith.mulf %296, %297 : vector<16x8xf32>
    %c0_82 = arith.constant 0 : index
    %c8 = arith.constant 8 : index
    %299 = vector.load %arg8[%c0_82, %c8] : memref<1x16xf32, #tpu.memory_space<vmem>>, vector<1x8xf32>
    %300 = vector.broadcast %299 : vector<1x8xf32> to vector<16x8xf32>
    %301 = arith.addf %298, %300 : vector<16x8xf32>
    %302 = arith.maximumf %124, %215 : vector<16x8xf32>
    %303 = arith.truncf %302 : vector<16x8xf32> to vector<16x8xbf16>
    %cst_83 = arith.constant dense<0.000000e+00> : vector<16x16xf32>
    %304 = tpu.matmul %303, %303, %cst_83 {dimension_numbers = #tpu.dot_dimension_numbers<[1], [1], [0], [0], [0, 0, 1, 0], [], []>} : vector<16x8xbf16>, vector<16x8xbf16>, vector<16x16xf32> -> vector<16x16xf32>
    %305 = arith.negf %304 : vector<16x16xf32>
    %306 = math.exp %305 : vector<16x16xf32>
    %cst_84 = arith.constant 1.000000e+00 : f32
    %307 = vector.broadcast %cst_84 : f32 to vector<16x16xf32>
    %308 = arith.addf %307, %306 : vector<16x16xf32>
    %309 = arith.divf %307, %308 : vector<16x16xf32>
    %c0_85 = arith.constant 0 : index
    %c0_86 = arith.constant 0 : index
    %310 = vector.load %arg9[%c0_85, %c0_86] : memref<16x16xf32, #tpu.memory_space<vmem>>, vector<16x16xf32>
    tpu.vector_store %arg9[%c0_85, %c0_86], %309 {strides = array<i32>} : memref<16x16xf32, #tpu.memory_space<vmem>>, vector<16x16xf32>,
    %311 = arith.maximumf %125, %301 : vector<16x8xf32>
    %312 = tpu.concatenate %302, %311 in 1 : vector<16x8xf32>, vector<16x8xf32> -> vector<16x16xf32>
    %c0_87 = arith.constant 0 : index
    %c0_88 = arith.constant 0 : index
    %313 = vector.load %arg10[%c0_87, %c0_88] : memref<16x16xf32, #tpu.memory_space<vmem>>, vector<16x16xf32>
    tpu.vector_store %arg10[%c0_87, %c0_88], %312 {strides = array<i32>} : memref<16x16xf32, #tpu.memory_space<vmem>>, vector<16x16xf32>,
    return
  }
}

</mosaic_0001>

<llo_original>
// kernel: gcn_gat_vgae_forward.1
$region0: #{gcn_gat_vgae_forward.1}
  #allocation0 [shape = 'u32[]', space=smem, size = 0x4, offset = 0x4, fixed_abs, tag = 'smem constant byte address 0x4 - core index']
  #allocation1 [shape = 'u32[144,128]{1,0:T(1,128)}', space=vmem, size = 0x12000, scoped, tag = 'internal scratch']
  %s0 = inlined_call_operand.vmem [shape: f32[16,8], index: 0, kind: input, shape index: {}]
  %s1 = inlined_call_operand.vmem [shape: bf16[16,16], index: 1, kind: input, shape index: {}]
  %s2 = inlined_call_operand.vmem [shape: f32[8,70], index: 2, kind: input, shape index: {}]
  %s3 = inlined_call_operand.vmem [shape: f32[1,16], index: 3, kind: input, shape index: {}]
  %s4 = inlined_call_operand.vmem [shape: f32[1,48], index: 4, kind: input, shape index: {}]
  %s5 = inlined_call_operand.vmem [shape: f32[16,16], index: 5, kind: input, shape index: {}]
  %s6 = inlined_call_operand.vmem [shape: f32[1,16], index: 6, kind: input, shape index: {}]
  %s7 = inlined_call_operand.vmem [shape: f32[48,60], index: 7, kind: input, shape index: {}]
  %s8 = inlined_call_operand.vmem [shape: f32[1,16], index: 8, kind: input, shape index: {}]
  %s9 = inlined_call_operand.hbm [shape: f32[16,16], index: 9, kind: output, shape index: {0}]
  %s10 = inlined_call_operand.vmem [shape: f32[16,16], index: 10, kind: output, shape index: {1}]
  %11 = xla_tuple %s9, %s10
  %s12 = sld [smem:[#allocation0]]
  $region54: #{gcn_gat_vgae_forward.1} parent=0
    _
  %s14 = ssub.s32 1, %s12
  %s15 = scalar_select 0, %s14, %s12
  $region1: #{gcn_gat_vgae_forward.1} parent=0
    #allocation2 [shape = 'u8[8192]{0}', space=vmem, size = 0x2000, scoped, tag = 'output window, operand 0, single buffered']
    #allocation3 [shape = 's32[1]{0}', space=sflag, size = 0x4, scoped, tag = 'scoped memory for gcn_gat_vgae_forward.1']
    %16 = vsyncpa [#allocation3], 0
    // Predicated region
    $region2: #{gcn_gat_vgae_forward.1} parent=1 // pred_check
      _
    $region3: #{gcn_gat_vgae_forward.1} parent=1 // pred_check_branch
      %18 = sbr.rel (0) target = $region5
    $region4: #{gcn_gat_vgae_forward.1} parent=1 // pred_region
      _
    $region5: #{gcn_gat_vgae_forward.1} parent=1 // pred_fallthru
      _
    // Predicated region
    $region6: #{gcn_gat_vgae_forward.1} parent=1 // pred_check
      _
    $region7: #{gcn_gat_vgae_forward.1} parent=1 // pred_check_branch
      %20 = sbr.rel (0) target = $region9
    $region8: #{gcn_gat_vgae_forward.1} parent=1 // pred_region
      _
    $region9: #{gcn_gat_vgae_forward.1} parent=1 // pred_fallthru
      _
    // Predicated region
    $region10: #{gcn_gat_vgae_forward.1} parent=1 // pred_check
      _
    $region11: #{gcn_gat_vgae_forward.1} parent=1 // pred_check_branch
      %22 = sbr.rel (0) target = $region13
    $region12: #{gcn_gat_vgae_forward.1} parent=1 // pred_region
      _
    $region13: #{gcn_gat_vgae_forward.1} parent=1 // pred_fallthru
      _
    // Predicated region
    $region14: #{gcn_gat_vgae_forward.1} parent=1 // pred_check
      _
    $region15: #{gcn_gat_vgae_forward.1} parent=1 // pred_check_branch
      %24 = sbr.rel (0) target = $region17
    $region16: #{gcn_gat_vgae_forward.1} parent=1 // pred_region
      _
    $region17: #{gcn_gat_vgae_forward.1} parent=1 // pred_fallthru
      _
    // Predicated region
    $region18: #{gcn_gat_vgae_forward.1} parent=1 // pred_check
      _
    $region19: #{gcn_gat_vgae_forward.1} parent=1 // pred_check_branch
      %26 = sbr.rel (0) target = $region21
    $region20: #{gcn_gat_vgae_forward.1} parent=1 // pred_region
      _
    $region21: #{gcn_gat_vgae_forward.1} parent=1 // pred_fallthru
      _
    // Predicated region
    $region22: #{gcn_gat_vgae_forward.1} parent=1 // pred_check
      _
    $region23: #{gcn_gat_vgae_forward.1} parent=1 // pred_check_branch
      %28 = sbr.rel (0) target = $region25
    $region24: #{gcn_gat_vgae_forward.1} parent=1 // pred_region
      _
    $region25: #{gcn_gat_vgae_forward.1} parent=1 // pred_fallthru
      _
    // Predicated region
    $region26: #{gcn_gat_vgae_forward.1} parent=1 // pred_check
      _
    $region27: #{gcn_gat_vgae_forward.1} parent=1 // pred_check_branch
      %30 = sbr.rel (0) target = $region29
    $region28: #{gcn_gat_vgae_forward.1} parent=1 // pred_region
      _
    $region29: #{gcn_gat_vgae_forward.1} parent=1 // pred_fallthru
      _
    // Predicated region
    $region30: #{gcn_gat_vgae_forward.1} parent=1 // pred_check
      _
    $region31: #{gcn_gat_vgae_forward.1} parent=1 // pred_check_branch
      %32 = sbr.rel (0) target = $region33
    $region32: #{gcn_gat_vgae_forward.1} parent=1 // pred_region
      _
    $region33: #{gcn_gat_vgae_forward.1} parent=1 // pred_fallthru
      _
    // Predicated region
    $region34: #{gcn_gat_vgae_forward.1} parent=1 // pred_check
      _
    $region35: #{gcn_gat_vgae_forward.1} parent=1 // pred_check_branch
      %34 = sbr.rel (0) target = $region37
    $region36: #{gcn_gat_vgae_forward.1} parent=1 // pred_region
      _
    $region37: #{gcn_gat_vgae_forward.1} parent=1 // pred_fallthru
      _
    %v38 = vld [vmem:[%s1] sm:$0xf]
    %v39 = vld [vmem:[%s1 + $0x4] sm:$0xf]
    %vm40 = vcmp.gt.bf16.partialorder %v38, 0
    %vm41 = vcmp.gt.bf16.partialorder %v39, 0
    %v42 = vld [vmem:[%s0] sm:$0xff]
    %v43 = vld [vmem:[%s0 + $0x8] sm:$0xff]
    %v44 = vpack.c.bf16 %v43, %v42
    %v45 = vunpack.c.l.bf16 %v38
    %v46 = vunpack.c.l.bf16 %v39
    %vm47 = vcmask 130048
    %v48 = vsel %vm47, %v45, 0.0
    %49 = vadd.xlane.f32.xlu0 %v48
    %v50 = vpop.xlane.xlu0 %49
    %v51 = vsel %vm47, %v46, 0.0
    %52 = vadd.xlane.f32.xlu0 %v51
    %v53 = vpop.xlane.xlu0 %52
    %v54 = vmax.f32 %v50, 1e-12
    %v55 = vmax.f32 %v53, 1e-12
    %v56 = vrsqrt.pop %v54
    %v57 = vrsqrt.pop %v55
    %v58 = vld [vmem:[%s2] sm:$0xff]
    %v59 = vpack.c.bf16 %v58, %v58
    %vm60 = vcmask 64512
    %v62 = vsel %vm60, %v44, 0
    %vm64 = vcmask 1043456
    %v66 = vsel %vm64, %v59, 0
    %68 = vmatprep.subr.bf16.mxu0 0
    %69 = vmatpush1.bf16.msra.mxu0 0
    %70 = vmatprep.subr.bf16.mxu0 0
    %71 = vmatpush1.bf16.msra.mxu0 0
    %72 = vmatprep.subr.bf16.mxu0 0
    %73 = vmatpush1.bf16.msra.mxu0 0
    %74 = vmatprep.subr.bf16.mxu0 0
    %75 = vmatpush1.bf16.msra.mxu0 0
    %76 = vmatprep.subr.bf16.mxu0 0
    %77 = vmatpush1.bf16.msra.mxu0 0
    %78 = vmatprep.subr.bf16.mxu0 0
    %79 = vmatpush1.bf16.msra.mxu0 0
    %80 = vmatprep.subr.bf16.mxu0 0
    %81 = vmatpush1.bf16.msra.mxu0 0
    %82 = vmatprep.subr.bf16.mxu0 0
    %83 = vmatpush1.bf16.msra.mxu0 %v66
    %84 = vmatprep.subr.bf16.mxu0 0
    %85 = vmatpush2.bf16.msra.mxu0 0
    %86 = vmatprep.subr.bf16.mxu0 0
    %87 = vmatpush2.bf16.msra.mxu0 0
    %88 = vmatprep.subr.bf16.mxu0 0
    %89 = vmatpush2.bf16.msra.mxu0 0
    %90 = vmatprep.subr.bf16.mxu0 0
    %91 = vmatpush2.bf16.msra.mxu0 0
    %92 = vmatprep.subr.bf16.mxu0 0
    %93 = vmatpush2.bf16.msra.mxu0 0
    %94 = vmatprep.subr.bf16.mxu0 0
    %95 = vmatpush2.bf16.msra.mxu0 0
    %96 = vmatprep.subr.bf16.mxu0 0
    %97 = vmatpush2.bf16.msra.mxu0 0
    %98 = vmatprep.subr.bf16.mxu0 0
    %99 = vmatpush2.bf16.msra.mxu0 0
    %100 = vmatprep.mubr.bf16.mxu0 0
    %101 = vmatmul.mubr.bf16.gmra.mxu0 %v62
    %v102 = vpop.f32.mrf.mxu0
    %v103 = vadd.f32 0.0, %v102
    %v104 = vpop.f32.mrf.mxu0
    %v105 = vpop.f32.mrf.mxu0
    %v106 = vadd.f32 0.0, %v105
    %v107 = vpop.f32.mrf.mxu0
    %108 = vdwg.mxu0
    %v109 = vmul.f32 %v56, %v103
    %v110 = vmul.f32 %v57, %v106
    %v111 = vpack.c.bf16 %v110, %v109
    %v114 = vunpack.c.l.b16 %v38
    %v115 = vunpack.c.l.b16 %v39
    %v116 = vpack.c.b16 %v115, %v114
    %v118 = vsel %vm47, %v116, 0
    %120 = vmatprep.subr.bf16.mxu0 0
    %121 = vmatpush1.bf16.msra.mxu0 0
    %122 = vmatprep.subr.bf16.mxu0 0
    %123 = vmatpush1.bf16.msra.mxu0 0
    %124 = vmatprep.subr.bf16.mxu0 0
    %125 = vmatpush1.bf16.msra.mxu0 0
    %126 = vmatprep.subr.bf16.mxu0 0
    %127 = vmatpush1.bf16.msra.mxu0 0
    %128 = vmatprep.subr.bf16.mxu0 0
    %129 = vmatpush1.bf16.msra.mxu0 0
    %130 = vmatprep.subr.bf16.mxu0 0
    %131 = vmatpush1.bf16.msra.mxu0 0
    %132 = vmatprep.subr.bf16.mxu0 0
    %133 = vmatpush1.bf16.msra.mxu0 0
    %134 = vmatprep.subr.bf16.mxu0 0
    %135 = vmatpush1.bf16.msra.mxu0 %v111
    %136 = vmatprep.subr.bf16.mxu0 0
    %137 = vmatpush2.bf16.msra.mxu0 0
    %138 = vmatprep.subr.bf16.mxu0 0
    %139 = vmatpush2.bf16.msra.mxu0 0
    %140 = vmatprep.subr.bf16.mxu0 0
    %141 = vmatpush2.bf16.msra.mxu0 0
    %142 = vmatprep.subr.bf16.mxu0 0
    %143 = vmatpush2.bf16.msra.mxu0 0
    %144 = vmatprep.subr.bf16.mxu0 0
    %145 = vmatpush2.bf16.msra.mxu0 0
    %146 = vmatprep.subr.bf16.mxu0 0
    %147 = vmatpush2.bf16.msra.mxu0 0
    %148 = vmatprep.subr.bf16.mxu0 0
    %149 = vmatpush2.bf16.msra.mxu0 0
    %150 = vmatprep.subr.bf16.mxu0 0
    %151 = vmatpush2.bf16.msra.mxu0 0
    %152 = vmatprep.mubr.bf16.mxu0 0
    %153 = vmatmul.mubr.bf16.gmra.mxu0 %v118
    %v154 = vpop.f32.mrf.mxu0
    %v155 = vadd.f32 0.0, %v154
    %v156 = vpop.f32.mrf.mxu0
    %v157 = vpop.f32.mrf.mxu0
    %v158 = vadd.f32 0.0, %v157
    %v159 = vpop.f32.mrf.mxu0
    %160 = vdwg.mxu0
    %v161 = vmul.f32 %v56, %v155
    %v162 = vmul.f32 %v57, %v158
    %v163 = vld [vmem:[%s3] sm:$0x1]
    %v165 = vlaneseq
    %v166 = vshrl.u32 %v165, 7
    %v167 = vsub.s32 0, %v166
    %v168 = vrot.slane %v163, %v167
    %v170 = vadd.f32 %v161, %v168
    %v171 = vadd.f32 %v162, %v168
    %v172 = vmax.f32 %v170, 0.0
    %v173 = vmax.f32 %v171, 0.0
    %v174 = vpack.c.bf16 %v106, %v103
    %177 = vrot.lane.b32.xlu0 %v103, 64
    %v178 = vpop.permute.xlu0 %177
    %179 = vrot.lane.b32.xlu0 %v106, 64
    %v180 = vpop.permute.xlu0 %179
    %183 = vxpose.xlu0.b32.start [1/16] %v178, 128
    %184 = vxpose.xlu0.b32.cont [2/16] %v180, 128
    %185 = vxpose.xlu0.b32.cont [3/16] 0.0, 128
    %186 = vxpose.xlu0.b32.cont [4/16] 0.0, 128
    %187 = vxpose.xlu0.b32.cont [5/16] 0.0, 128
    %188 = vxpose.xlu0.b32.cont [6/16] 0.0, 128
    %189 = vxpose.xlu0.b32.cont [7/16] 0.0, 128
    %190 = vxpose.xlu0.b32.cont [8/16] 0.0, 128
    %191 = vxpose.xlu0.b32.cont [9/16] 0.0, 128
    %192 = vxpose.xlu0.b32.cont [10/16] 0.0, 128
    %193 = vxpose.xlu0.b32.cont [11/16] 0.0, 128
    %194 = vxpose.xlu0.b32.cont [12/16] 0.0, 128
    %195 = vxpose.xlu0.b32.cont [13/16] 0.0, 128
    %196 = vxpose.xlu0.b32.cont [14/16] 0.0, 128
    %197 = vxpose.xlu0.b32.cont [15/16] 0.0, 128
    %198 = vxpose.xlu0.b32.end [16/16] 0.0, 128
    %v199 = vpop.trf.xlu0
    %v200 = vpop.trf.xlu0
    %v201 = vpop.trf.xlu0
    %v202 = vpop.trf.xlu0
    %v203 = vpop.trf.xlu0
    %v204 = vpop.trf.xlu0
    %v205 = vpop.trf.xlu0
    %v206 = vpop.trf.xlu0
    %v207 = vpop.trf.xlu0
    %v208 = vpop.trf.xlu0
    %v209 = vpop.trf.xlu0
    %v210 = vpop.trf.xlu0
    %v211 = vpop.trf.xlu0
    %v212 = vpop.trf.xlu0
    %v213 = vpop.trf.xlu0
    %v214 = vpop.trf.xlu0
    %215 = vset.pattern.permute.xlu0 67
    %216 = vperm.xlu0 %215, %v103
    %v217 = vpop.permute.xlu0 %216
    %219 = vset.pattern.permute.xlu0 67
    %220 = vperm.xlu0 %219, %v106
    %v221 = vpop.permute.xlu0 %220
    %v223 = vlaneseq
    %v224 = vshrl.u32 %v223, 7
    %v225 = vsub.s32 0, %v224
    %v226 = vrot.slane %v199, %v225
    %v227 = vadd.f32 %v217, %v226
    %v228 = vadd.f32 %v221, %v226
    %vm229 = vcmp.gt.f32.partialorder %v227, 0.0
    %vm230 = vcmp.gt.f32.partialorder %v228, 0.0
    %v231 = vmul.f32 %v227, 0.2
    %v232 = vmul.f32 %v228, 0.2
    %v233 = vsel %vm229, %v227, %v231
    %v234 = vsel %vm230, %v228, %v232
    %v235 = vsel %vm40, 65537, 0
    %v236 = vsel %vm41, 65537, 0
    %v237 = vunpack.c.l.b16 %v235
    %v238 = vunpack.c.l.b16 %v236
    %vm239 = vcmp.ne.s32.totalorder %v237, 0
    %vm240 = vcmp.ne.s32.totalorder %v238, 0
    %v241 = vsel %vm239, %v233, -1e+09
    %v242 = vsel %vm240, %v234, -1e+09
    %v243 = vsel %vm47, %v241, -inf
    %244 = vmax.xlane.f32.xlu0 %v243
    %v245 = vpop.xlane.xlu0 %244
    %v246 = vsel %vm47, %v242, -inf
    %247 = vmax.xlane.f32.xlu0 %v246
    %v248 = vpop.xlane.xlu0 %247
    %v249 = vsub.f32 %v241, %v245
    %v250 = vsub.f32 %v242, %v248
    %v251 = vmul.f32 %v249, 1.442695
    %v252 = vpow.pop %v251
    %v253 = vmul.f32 %v250, 1.442695
    %v254 = vpow.pop %v253
    %v255 = vsel %vm47, %v252, 0.0
    %256 = vadd.xlane.f32.xlu0 %v255
    %v257 = vpop.xlane.xlu0 %256
    %v258 = vsel %vm47, %v254, 0.0
    %259 = vadd.xlane.f32.xlu0 %v258
    %v260 = vpop.xlane.xlu0 %259
    %v261 = vrcp.pop %v257
    %v262 = vrcp.pop %v260
    %v263 = vmul.f32 %v252, %v261
    %v264 = vmul.f32 %v254, %v262
    %v265 = vpack.c.bf16 %v264, %v263
    %267 = vrot.lane.b32.xlu0 %v174, 112
    %v268 = vpop.permute.xlu0 %267
    %v271 = vsel %vm47, %v265, 0
    %273 = vmatprep.subr.bf16.mxu0 0
    %274 = vmatpush1.bf16.msra.mxu0 0
    %275 = vmatprep.subr.bf16.mxu0 0
    %276 = vmatpush1.bf16.msra.mxu0 0
    %277 = vmatprep.subr.bf16.mxu0 0
    %278 = vmatpush1.bf16.msra.mxu0 0
    %279 = vmatprep.subr.bf16.mxu0 0
    %280 = vmatpush1.bf16.msra.mxu0 0
    %281 = vmatprep.subr.bf16.mxu0 0
    %282 = vmatpush1.bf16.msra.mxu0 0
    %283 = vmatprep.subr.bf16.mxu0 0
    %284 = vmatpush1.bf16.msra.mxu0 0
    %285 = vmatprep.subr.bf16.mxu0 0
    %286 = vmatpush1.bf16.msra.mxu0 0
    %287 = vmatprep.subr.bf16.mxu0 0
    %288 = vmatpush1.bf16.msra.mxu0 %v268
    %289 = vmatprep.subr.bf16.mxu0 0
    %290 = vmatpush2.bf16.msra.mxu0 0
    %291 = vmatprep.subr.bf16.mxu0 0
    %292 = vmatpush2.bf16.msra.mxu0 0
    %293 = vmatprep.subr.bf16.mxu0 0
    %294 = vmatpush2.bf16.msra.mxu0 0
    %295 = vmatprep.subr.bf16.mxu0 0
    %296 = vmatpush2.bf16.msra.mxu0 0
    %297 = vmatprep.subr.bf16.mxu0 0
    %298 = vmatpush2.bf16.msra.mxu0 0
    %299 = vmatprep.subr.bf16.mxu0 0
    %300 = vmatpush2.bf16.msra.mxu0 0
    %301 = vmatprep.subr.bf16.mxu0 0
    %302 = vmatpush2.bf16.msra.mxu0 0
    %303 = vmatprep.subr.bf16.mxu0 0
    %304 = vmatpush2.bf16.msra.mxu0 0
    %305 = vmatprep.mubr.bf16.mxu0 0
    %306 = vmatmul.mubr.bf16.gmra.mxu0 %v271
    %v307 = vpop.f32.mrf.mxu0
    %v308 = vadd.f32 0.0, %v307
    %v309 = vpop.f32.mrf.mxu0
    %v310 = vpop.f32.mrf.mxu0
    %v311 = vadd.f32 0.0, %v310
    %v312 = vpop.f32.mrf.mxu0
    %313 = vdwg.mxu0
    %314 = vset.pattern.permute.xlu0 68
    %315 = vperm.xlu0 %314, %v103
    %v316 = vpop.permute.xlu0 %315
    %318 = vset.pattern.permute.xlu0 68
    %319 = vperm.xlu0 %318, %v106
    %v320 = vpop.permute.xlu0 %319
    %v322 = vlaneseq
    %v323 = vshrl.u32 %v322, 7
    %v324 = vsub.s32 1, %v323
    %v325 = vrot.slane %v199, %v324
    %v326 = vadd.f32 %v316, %v325
    %v327 = vadd.f32 %v320, %v325
    %vm328 = vcmp.gt.f32.partialorder %v326, 0.0
    %vm329 = vcmp.gt.f32.partialorder %v327, 0.0
    %v330 = vmul.f32 %v326, 0.2
    %v331 = vmul.f32 %v327, 0.2
    %v332 = vsel %vm328, %v326, %v330
    %v333 = vsel %vm329, %v327, %v331
    %v334 = vsel %vm239, %v332, -1e+09
    %v335 = vsel %vm240, %v333, -1e+09
    %v336 = vsel %vm47, %v334, -inf
    %337 = vmax.xlane.f32.xlu0 %v336
    %v338 = vpop.xlane.xlu0 %337
    %v339 = vsel %vm47, %v335, -inf
    %340 = vmax.xlane.f32.xlu0 %v339
    %v341 = vpop.xlane.xlu0 %340
    %v342 = vsub.f32 %v334, %v338
    %v343 = vsub.f32 %v335, %v341
    %v344 = vmul.f32 %v342, 1.442695
    %v345 = vpow.pop %v344
    %v346 = vmul.f32 %v343, 1.442695
    %v347 = vpow.pop %v346
    %v348 = vsel %vm47, %v345, 0.0
    %349 = vadd.xlane.f32.xlu0 %v348
    %v350 = vpop.xlane.xlu0 %349
    %v351 = vsel %vm47, %v347, 0.0
    %352 = vadd.xlane.f32.xlu0 %v351
    %v353 = vpop.xlane.xlu0 %352
    %v354 = vrcp.pop %v350
    %v355 = vrcp.pop %v353
    %v356 = vmul.f32 %v345, %v354
    %v357 = vmul.f32 %v347, %v355
    %v358 = vpack.c.bf16 %v357, %v356
    %359 = vrot.lane.b32.xlu0 %v174, 96
    %v360 = vpop.permute.xlu0 %359
    %v363 = vsel %vm47, %v358, 0
    %365 = vmatprep.subr.bf16.mxu0 0
    %366 = vmatpush1.bf16.msra.mxu0 0
    %367 = vmatprep.subr.bf16.mxu0 0
    %368 = vmatpush1.bf16.msra.mxu0 0
    %369 = vmatprep.subr.bf16.mxu0 0
    %370 = vmatpush1.bf16.msra.mxu0 0
    %371 = vmatprep.subr.bf16.mxu0 0
    %372 = vmatpush1.bf16.msra.mxu0 0
    %373 = vmatprep.subr.bf16.mxu0 0
    %374 = vmatpush1.bf16.msra.mxu0 0
    %375 = vmatprep.subr.bf16.mxu0 0
    %376 = vmatpush1.bf16.msra.mxu0 0
    %377 = vmatprep.subr.bf16.mxu0 0
    %378 = vmatpush1.bf16.msra.mxu0 0
    %379 = vmatprep.subr.bf16.mxu0 0
    %380 = vmatpush1.bf16.msra.mxu0 %v360
    %381 = vmatprep.subr.bf16.mxu0 0
    %382 = vmatpush2.bf16.msra.mxu0 0
    %383 = vmatprep.subr.bf16.mxu0 0
    %384 = vmatpush2.bf16.msra.mxu0 0
    %385 = vmatprep.subr.bf16.mxu0 0
    %386 = vmatpush2.bf16.msra.mxu0 0
    %387 = vmatprep.subr.bf16.mxu0 0
    %388 = vmatpush2.bf16.msra.mxu0 0
    %389 = vmatprep.subr.bf16.mxu0 0
    %390 = vmatpush2.bf16.msra.mxu0 0
    %391 = vmatprep.subr.bf16.mxu0 0
    %392 = vmatpush2.bf16.msra.mxu0 0
    %393 = vmatprep.subr.bf16.mxu0 0
    %394 = vmatpush2.bf16.msra.mxu0 0
    %395 = vmatprep.subr.bf16.mxu0 0
    %396 = vmatpush2.bf16.msra.mxu0 0
    %397 = vmatprep.mubr.bf16.mxu0 0
    %398 = vmatmul.mubr.bf16.gmra.mxu0 %v363
    %v399 = vpop.f32.mrf.mxu0
    %v400 = vadd.f32 0.0, %v399
    %v401 = vpop.f32.mrf.mxu0
    %v402 = vpop.f32.mrf.mxu0
    %v403 = vadd.f32 0.0, %v402
    %v404 = vpop.f32.mrf.mxu0
    %405 = vdwg.mxu0
    %406 = vset.pattern.permute.xlu0 69
    %407 = vperm.xlu0 %406, %v103
    %v408 = vpop.permute.xlu0 %407
    %410 = vset.pattern.permute.xlu0 69
    %411 = vperm.xlu0 %410, %v106
    %v412 = vpop.permute.xlu0 %411
    %v414 = vlaneseq
    %v415 = vshrl.u32 %v414, 7
    %v416 = vsub.s32 2, %v415
    %v417 = vrot.slane %v199, %v416
    %v418 = vadd.f32 %v408, %v417
    %v419 = vadd.f32 %v412, %v417
    %vm420 = vcmp.gt.f32.partialorder %v418, 0.0
    %vm421 = vcmp.gt.f32.partialorder %v419, 0.0
    %v422 = vmul.f32 %v418, 0.2
    %v423 = vmul.f32 %v419, 0.2
    %v424 = vsel %vm420, %v418, %v422
    %v425 = vsel %vm421, %v419, %v423
    %v426 = vsel %vm239, %v424, -1e+09
    %v427 = vsel %vm240, %v425, -1e+09
    %v428 = vsel %vm47, %v426, -inf
    %429 = vmax.xlane.f32.xlu0 %v428
    %v430 = vpop.xlane.xlu0 %429
    %v431 = vsel %vm47, %v427, -inf
    %432 = vmax.xlane.f32.xlu0 %v431
    %v433 = vpop.xlane.xlu0 %432
    %v434 = vsub.f32 %v426, %v430
    %v435 = vsub.f32 %v427, %v433
    %v436 = vmul.f32 %v434, 1.442695
    %v437 = vpow.pop %v436
    %v438 = vmul.f32 %v435, 1.442695
    %v439 = vpow.pop %v438
    %v440 = vsel %vm47, %v437, 0.0
    %441 = vadd.xlane.f32.xlu0 %v440
    %v442 = vpop.xlane.xlu0 %441
    %v443 = vsel %vm47, %v439, 0.0
    %444 = vadd.xlane.f32.xlu0 %v443
    %v445 = vpop.xlane.xlu0 %444
    %v446 = vrcp.pop %v442
    %v447 = vrcp.pop %v445
    %v448 = vmul.f32 %v437, %v446
    %v449 = vmul.f32 %v439, %v447
    %v450 = vpack.c.bf16 %v449, %v448
    %451 = vrot.lane.b32.xlu0 %v174, 80
    %v452 = vpop.permute.xlu0 %451
    %v455 = vsel %vm47, %v450, 0
    %457 = vmatprep.subr.bf16.mxu0 0
    %458 = vmatpush1.bf16.msra.mxu0 0
    %459 = vmatprep.subr.bf16.mxu0 0
    %460 = vmatpush1.bf16.msra.mxu0 0
    %461 = vmatprep.subr.bf16.mxu0 0
    %462 = vmatpush1.bf16.msra.mxu0 0
    %463 = vmatprep.subr.bf16.mxu0 0
    %464 = vmatpush1.bf16.msra.mxu0 0
    %465 = vmatprep.subr.bf16.mxu0 0
    %466 = vmatpush1.bf16.msra.mxu0 0
    %467 = vmatprep.subr.bf16.mxu0 0
    %468 = vmatpush1.bf16.msra.mxu0 0
    %469 = vmatprep.subr.bf16.mxu0 0
    %470 = vmatpush1.bf16.msra.mxu0 0
    %471 = vmatprep.subr.bf16.mxu0 0
    %472 = vmatpush1.bf16.msra.mxu0 %v452
    %473 = vmatprep.subr.bf16.mxu0 0
    %474 = vmatpush2.bf16.msra.mxu0 0
    %475 = vmatprep.subr.bf16.mxu0 0
    %476 = vmatpush2.bf16.msra.mxu0 0
    %477 = vmatprep.subr.bf16.mxu0 0
    %478 = vmatpush2.bf16.msra.mxu0 0
    %479 = vmatprep.subr.bf16.mxu0 0
    %480 = vmatpush2.bf16.msra.mxu0 0
    %481 = vmatprep.subr.bf16.mxu0 0
    %482 = vmatpush2.bf16.msra.mxu0 0
    %483 = vmatprep.subr.bf16.mxu0 0
    %484 = vmatpush2.bf16.msra.mxu0 0
    %485 = vmatprep.subr.bf16.mxu0 0
    %486 = vmatpush2.bf16.msra.mxu0 0
    %487 = vmatprep.subr.bf16.mxu0 0
    %488 = vmatpush2.bf16.msra.mxu0 0
    %489 = vmatprep.mubr.bf16.mxu0 0
    %490 = vmatmul.mubr.bf16.gmra.mxu0 %v455
    %v491 = vpop.f32.mrf.mxu0
    %v492 = vadd.f32 0.0, %v491
    %v493 = vpop.f32.mrf.mxu0
    %v494 = vpop.f32.mrf.mxu0
    %v495 = vadd.f32 0.0, %v494
    %v496 = vpop.f32.mrf.mxu0
    %497 = vdwg.mxu0
    %500 = vrot.lane.b32.xlu0 %v400, 16
    %v501 = vpop.permute.xlu0 %500
    %502 = vrot.lane.b32.xlu0 %v403, 16
    %v503 = vpop.permute.xlu0 %502
    %508 = vrot.lane.b32.xlu0 %v492, 32
    %v509 = vpop.permute.xlu0 %508
    %510 = vrot.lane.b32.xlu0 %v495, 32
    %v511 = vpop.permute.xlu0 %510
    %v514 = vsel %vm47, %v308, %v501
    %v515 = vsel %vm47, %v311, %v503
    %vm516 = vcmask 261120
    %v517 = vsel %vm516, %v514, %v509
    %v518 = vsel %vm516, %v515, %v511
    %v519 = vld [vmem:[%s4] sm:$0x1]
    %v521 = vlaneseq
    %v522 = vshrl.u32 %v521, 7
    %v523 = vsub.s32 0, %v522
    %v524 = vrot.slane %v519, %v523
    %v526 = vadd.f32 %v517, %v524
    %v527 = vadd.f32 %v518, %v524
    %v528 = vmax.f32 %v526, 0.0
    %v529 = vmax.f32 %v527, 0.0
    %v530 = vpack.c.bf16 %v173, %v172
    %v531 = vld [vmem:[%s5] sm:$0xff]
    %v532 = vld [vmem:[%s5 + $0x8] sm:$0xff]
    %v533 = vpack.c.bf16 %v532, %v531
    %v535 = vsel %vm47, %v530, 0
    %537 = vmatprep.subr.bf16.mxu0 0
    %538 = vmatpush1.bf16.msra.mxu0 0
    %539 = vmatprep.subr.bf16.mxu0 0
    %540 = vmatpush1.bf16.msra.mxu0 0
    %541 = vmatprep.subr.bf16.mxu0 0
    %542 = vmatpush1.bf16.msra.mxu0 0
    %543 = vmatprep.subr.bf16.mxu0 0
    %544 = vmatpush1.bf16.msra.mxu0 0
    %545 = vmatprep.subr.bf16.mxu0 0
    %546 = vmatpush1.bf16.msra.mxu0 0
    %547 = vmatprep.subr.bf16.mxu0 0
    %548 = vmatpush1.bf16.msra.mxu0 0
    %549 = vmatprep.subr.bf16.mxu0 0
    %550 = vmatpush1.bf16.msra.mxu0 0
    %551 = vmatprep.subr.bf16.mxu0 0
    %552 = vmatpush1.bf16.msra.mxu0 %v533
    %553 = vmatprep.subr.bf16.mxu0 0
    %554 = vmatpush2.bf16.msra.mxu0 0
    %555 = vmatprep.subr.bf16.mxu0 0
    %556 = vmatpush2.bf16.msra.mxu0 0
    %557 = vmatprep.subr.bf16.mxu0 0
    %558 = vmatpush2.bf16.msra.mxu0 0
    %559 = vmatprep.subr.bf16.mxu0 0
    %560 = vmatpush2.bf16.msra.mxu0 0
    %561 = vmatprep.subr.bf16.mxu0 0
    %562 = vmatpush2.bf16.msra.mxu0 0
    %563 = vmatprep.subr.bf16.mxu0 0
    %564 = vmatpush2.bf16.msra.mxu0 0
    %565 = vmatprep.subr.bf16.mxu0 0
    %566 = vmatpush2.bf16.msra.mxu0 0
    %567 = vmatprep.subr.bf16.mxu0 0
    %568 = vmatpush2.bf16.msra.mxu0 0
    %569 = vmatprep.mubr.bf16.mxu0 0
    %570 = vmatmul.mubr.bf16.gmra.mxu0 %v535
    %v571 = vpop.f32.mrf.mxu0
    %v572 = vadd.f32 0.0, %v571
    %v573 = vpop.f32.mrf.mxu0
    %v574 = vpop.f32.mrf.mxu0
    %v575 = vadd.f32 0.0, %v574
    %v576 = vpop.f32.mrf.mxu0
    %577 = vdwg.mxu0
    %v578 = vmul.f32 %v56, %v572
    %v579 = vmul.f32 %v57, %v575
    %v580 = vpack.c.bf16 %v579, %v578
    %581 = vmatprep.subr.bf16.mxu0 0
    %582 = vmatpush1.bf16.msra.mxu0 0
    %583 = vmatprep.subr.bf16.mxu0 0
    %584 = vmatpush1.bf16.msra.mxu0 0
    %585 = vmatprep.subr.bf16.mxu0 0
    %586 = vmatpush1.bf16.msra.mxu0 0
    %587 = vmatprep.subr.bf16.mxu0 0
    %588 = vmatpush1.bf16.msra.mxu0 0
    %589 = vmatprep.subr.bf16.mxu0 0
    %590 = vmatpush1.bf16.msra.mxu0 0
    %591 = vmatprep.subr.bf16.mxu0 0
    %592 = vmatpush1.bf16.msra.mxu0 0
    %593 = vmatprep.subr.bf16.mxu0 0
    %594 = vmatpush1.bf16.msra.mxu0 0
    %595 = vmatprep.subr.bf16.mxu0 0
    %596 = vmatpush1.bf16.msra.mxu0 %v580
    %597 = vmatprep.subr.bf16.mxu0 0
    %598 = vmatpush2.bf16.msra.mxu0 0
    %599 = vmatprep.subr.bf16.mxu0 0
    %600 = vmatpush2.bf16.msra.mxu0 0
    %601 = vmatprep.subr.bf16.mxu0 0
    %602 = vmatpush2.bf16.msra.mxu0 0
    %603 = vmatprep.subr.bf16.mxu0 0
    %604 = vmatpush2.bf16.msra.mxu0 0
    %605 = vmatprep.subr.bf16.mxu0 0
    %606 = vmatpush2.bf16.msra.mxu0 0
    %607 = vmatprep.subr.bf16.mxu0 0
    %608 = vmatpush2.bf16.msra.mxu0 0
    %609 = vmatprep.subr.bf16.mxu0 0
    %610 = vmatpush2.bf16.msra.mxu0 0
    %611 = vmatprep.subr.bf16.mxu0 0
    %612 = vmatpush2.bf16.msra.mxu0 0
    %613 = vmatprep.mubr.bf16.mxu0 0
    %614 = vmatmul.mubr.bf16.gmra.mxu0 %v118
    %v615 = vpop.f32.mrf.mxu0
    %v616 = vadd.f32 0.0, %v615
    %v617 = vpop.f32.mrf.mxu0
    %v618 = vpop.f32.mrf.mxu0
    %v619 = vadd.f32 0.0, %v618
    %v620 = vpop.f32.mrf.mxu0
    %621 = vdwg.mxu0
    %v622 = vmul.f32 %v56, %v616
    %v623 = vmul.f32 %v57, %v619
    %v624 = vld [vmem:[%s6] sm:$0x1]
    %v626 = vlaneseq
    %v627 = vshrl.u32 %v626, 7
    %v628 = vsub.s32 0, %v627
    %v629 = vrot.slane %v624, %v628
    %v631 = vadd.f32 %v622, %v629
    %v632 = vadd.f32 %v623, %v629
    %v633 = vpack.c.bf16 %v529, %v528
    %v634 = vld [vmem:[%s7] sm:$0xff]
    %v635 = vld [vmem:[%s7 + $0x8] sm:$0xff]
    %v636 = vld [vmem:[%s7 + $0x10] sm:$0xff]
    %v637 = vld [vmem:[%s7 + $0x18] sm:$0xff]
    %v638 = vld [vmem:[%s7 + $0x20] sm:$0xff]
    %v639 = vld [vmem:[%s7 + $0x28] sm:$0xff]
    %v640 = vpack.c.bf16 %v635, %v634
    %v641 = vpack.c.bf16 %v637, %v636
    %v642 = vpack.c.bf16 %v639, %v638
    %vm643 = vcmask 392192
    %v645 = vsel %vm643, %v633, 0
    %647 = vmatprep.subr.bf16.mxu0 0
    %648 = vmatpush1.bf16.msra.mxu0 0
    %649 = vmatprep.subr.bf16.mxu0 0
    %650 = vmatpush1.bf16.msra.mxu0 0
    %651 = vmatprep.subr.bf16.mxu0 0
    %652 = vmatpush1.bf16.msra.mxu0 0
    %653 = vmatprep.subr.bf16.mxu0 0
    %654 = vmatpush1.bf16.msra.mxu0 0
    %655 = vmatprep.subr.bf16.mxu0 0
    %656 = vmatpush1.bf16.msra.mxu0 0
    %657 = vmatprep.subr.bf16.mxu0 0
    %658 = vmatpush1.bf16.msra.mxu0 %v642
    %659 = vmatprep.subr.bf16.mxu0 0
    %660 = vmatpush1.bf16.msra.mxu0 %v641
    %661 = vmatprep.subr.bf16.mxu0 0
    %662 = vmatpush1.bf16.msra.mxu0 %v640
    %663 = vmatprep.subr.bf16.mxu0 0
    %664 = vmatpush2.bf16.msra.mxu0 0
    %665 = vmatprep.subr.bf16.mxu0 0
    %666 = vmatpush2.bf16.msra.mxu0 0
    %667 = vmatprep.subr.bf16.mxu0 0
    %668 = vmatpush2.bf16.msra.mxu0 0
    %669 = vmatprep.subr.bf16.mxu0 0
    %670 = vmatpush2.bf16.msra.mxu0 0
    %671 = vmatprep.subr.bf16.mxu0 0
    %672 = vmatpush2.bf16.msra.mxu0 0
    %673 = vmatprep.subr.bf16.mxu0 0
    %674 = vmatpush2.bf16.msra.mxu0 0
    %675 = vmatprep.subr.bf16.mxu0 0
    %676 = vmatpush2.bf16.msra.mxu0 0
    %677 = vmatprep.subr.bf16.mxu0 0
    %678 = vmatpush2.bf16.msra.mxu0 0
    %679 = vmatprep.mubr.bf16.mxu0 0
    %680 = vmatmul.mubr.bf16.gmra.mxu0 %v645
    %v681 = vpop.f32.mrf.mxu0
    %v682 = vadd.f32 0.0, %v681
    %v683 = vpop.f32.mrf.mxu0
    %v684 = vpop.f32.mrf.mxu0
    %v685 = vadd.f32 0.0, %v684
    %v686 = vpop.f32.mrf.mxu0
    %687 = vdwg.mxu0
    %v688 = vpack.c.bf16 %v685, %v682
    %691 = vrot.lane.b32.xlu0 %v682, 80
    %v692 = vpop.permute.xlu0 %691
    %693 = vrot.lane.b32.xlu0 %v685, 80
    %v694 = vpop.permute.xlu0 %693
    %697 = vxpose.xlu0.b32.start [1/16] %v692, 128
    %698 = vxpose.xlu0.b32.cont [2/16] %v694, 128
    %699 = vxpose.xlu0.b32.cont [3/16] 0.0, 128
    %700 = vxpose.xlu0.b32.cont [4/16] 0.0, 128
    %701 = vxpose.xlu0.b32.cont [5/16] 0.0, 128
    %702 = vxpose.xlu0.b32.cont [6/16] 0.0, 128
    %703 = vxpose.xlu0.b32.cont [7/16] 0.0, 128
    %704 = vxpose.xlu0.b32.cont [8/16] 0.0, 128
    %705 = vxpose.xlu0.b32.cont [9/16] 0.0, 128
    %706 = vxpose.xlu0.b32.cont [10/16] 0.0, 128
    %707 = vxpose.xlu0.b32.cont [11/16] 0.0, 128
    %708 = vxpose.xlu0.b32.cont [12/16] 0.0, 128
    %709 = vxpose.xlu0.b32.cont [13/16] 0.0, 128
    %710 = vxpose.xlu0.b32.cont [14/16] 0.0, 128
    %711 = vxpose.xlu0.b32.cont [15/16] 0.0, 128
    %712 = vxpose.xlu0.b32.end [16/16] 0.0, 128
    %v713 = vpop.trf.xlu0
    %v714 = vpop.trf.xlu0
    %v715 = vpop.trf.xlu0
    %v716 = vpop.trf.xlu0
    %v717 = vpop.trf.xlu0
    %v718 = vpop.trf.xlu0
    %v719 = vpop.trf.xlu0
    %v720 = vpop.trf.xlu0
    %v721 = vpop.trf.xlu0
    %v722 = vpop.trf.xlu0
    %v723 = vpop.trf.xlu0
    %v724 = vpop.trf.xlu0
    %v725 = vpop.trf.xlu0
    %v726 = vpop.trf.xlu0
    %v727 = vpop.trf.xlu0
    %v728 = vpop.trf.xlu0
    %729 = vset.pattern.permute.xlu0 51
    %730 = vperm.xlu0 %729, %v682
    %v731 = vpop.permute.xlu0 %730
    %733 = vset.pattern.permute.xlu0 51
    %734 = vperm.xlu0 %733, %v685
    %v735 = vpop.permute.xlu0 %734
    %v737 = vlaneseq
    %v738 = vshrl.u32 %v737, 7
    %v739 = vsub.s32 0, %v738
    %v740 = vrot.slane %v713, %v739
    %v741 = vadd.f32 %v731, %v740
    %v742 = vadd.f32 %v735, %v740
    %vm743 = vcmp.gt.f32.partialorder %v741, 0.0
    %vm744 = vcmp.gt.f32.partialorder %v742, 0.0
    %v745 = vmul.f32 %v741, 0.2
    %v746 = vmul.f32 %v742, 0.2
    %v747 = vsel %vm743, %v741, %v745
    %v748 = vsel %vm744, %v742, %v746
    %v749 = vsel %vm239, %v747, -1e+09
    %v750 = vsel %vm240, %v748, -1e+09
    %v751 = vsel %vm47, %v749, -inf
    %752 = vmax.xlane.f32.xlu0 %v751
    %v753 = vpop.xlane.xlu0 %752
    %v754 = vsel %vm47, %v750, -inf
    %755 = vmax.xlane.f32.xlu0 %v754
    %v756 = vpop.xlane.xlu0 %755
    %v757 = vsub.f32 %v749, %v753
    %v758 = vsub.f32 %v750, %v756
    %v759 = vmul.f32 %v757, 1.442695
    %v760 = vpow.pop %v759
    %v761 = vmul.f32 %v758, 1.442695
    %v762 = vpow.pop %v761
    %v763 = vsel %vm47, %v760, 0.0
    %764 = vadd.xlane.f32.xlu0 %v763
    %v765 = vpop.xlane.xlu0 %764
    %v766 = vsel %vm47, %v762, 0.0
    %767 = vadd.xlane.f32.xlu0 %v766
    %v768 = vpop.xlane.xlu0 %767
    %v769 = vrcp.pop %v765
    %v770 = vrcp.pop %v768
    %v771 = vmul.f32 %v760, %v769
    %v772 = vmul.f32 %v762, %v770
    %v773 = vpack.c.bf16 %v772, %v771
    %774 = vset.pattern.permute.xlu0 52
    %775 = vperm.xlu0 %774, %v682
    %v776 = vpop.permute.xlu0 %775
    %778 = vset.pattern.permute.xlu0 52
    %779 = vperm.xlu0 %778, %v685
    %v780 = vpop.permute.xlu0 %779
    %v782 = vlaneseq
    %v783 = vshrl.u32 %v782, 7
    %v784 = vsub.s32 1, %v783
    %v785 = vrot.slane %v713, %v784
    %v786 = vadd.f32 %v776, %v785
    %v787 = vadd.f32 %v780, %v785
    %vm788 = vcmp.gt.f32.partialorder %v786, 0.0
    %vm789 = vcmp.gt.f32.partialorder %v787, 0.0
    %v790 = vmul.f32 %v786, 0.2
    %v791 = vmul.f32 %v787, 0.2
    %v792 = vsel %vm788, %v786, %v790
    %v793 = vsel %vm789, %v787, %v791
    %v794 = vsel %vm239, %v792, -1e+09
    %v795 = vsel %vm240, %v793, -1e+09
    %v796 = vsel %vm47, %v794, -inf
    %797 = vmax.xlane.f32.xlu0 %v796
    %v798 = vpop.xlane.xlu0 %797
    %v799 = vsel %vm47, %v795, -inf
    %800 = vmax.xlane.f32.xlu0 %v799
    %v801 = vpop.xlane.xlu0 %800
    %v802 = vsub.f32 %v794, %v798
    %v803 = vsub.f32 %v795, %v801
    %v804 = vmul.f32 %v802, 1.442695
    %v805 = vpow.pop %v804
    %v806 = vmul.f32 %v803, 1.442695
    %v807 = vpow.pop %v806
    %v808 = vsel %vm47, %v805, 0.0
    %809 = vadd.xlane.f32.xlu0 %v808
    %v810 = vpop.xlane.xlu0 %809
    %v811 = vsel %vm47, %v807, 0.0
    %812 = vadd.xlane.f32.xlu0 %v811
    %v813 = vpop.xlane.xlu0 %812
    %v814 = vrcp.pop %v810
    %v815 = vrcp.pop %v813
    %v816 = vmul.f32 %v805, %v814
    %v817 = vmul.f32 %v807, %v815
    %v818 = vpack.c.bf16 %v817, %v816
    %820 = vrot.lane.b32.xlu0 %v688, 120
    %v821 = vpop.permute.xlu0 %820
    %v824 = vsel %vm47, %v818, 0
    %826 = vmatprep.subr.bf16.mxu0 0
    %827 = vmatpush1.bf16.msra.mxu0 0
    %828 = vmatprep.subr.bf16.mxu0 0
    %829 = vmatpush1.bf16.msra.mxu0 0
    %830 = vmatprep.subr.bf16.mxu0 0
    %831 = vmatpush1.bf16.msra.mxu0 0
    %832 = vmatprep.subr.bf16.mxu0 0
    %833 = vmatpush1.bf16.msra.mxu0 0
    %834 = vmatprep.subr.bf16.mxu0 0
    %835 = vmatpush1.bf16.msra.mxu0 0
    %836 = vmatprep.subr.bf16.mxu0 0
    %837 = vmatpush1.bf16.msra.mxu0 0
    %838 = vmatprep.subr.bf16.mxu0 0
    %839 = vmatpush1.bf16.msra.mxu0 0
    %840 = vmatprep.subr.bf16.mxu0 0
    %841 = vmatpush1.bf16.msra.mxu0 %v821
    %842 = vmatprep.subr.bf16.mxu0 0
    %843 = vmatpush2.bf16.msra.mxu0 0
    %844 = vmatprep.subr.bf16.mxu0 0
    %845 = vmatpush2.bf16.msra.mxu0 0
    %846 = vmatprep.subr.bf16.mxu0 0
    %847 = vmatpush2.bf16.msra.mxu0 0
    %848 = vmatprep.subr.bf16.mxu0 0
    %849 = vmatpush2.bf16.msra.mxu0 0
    %850 = vmatprep.subr.bf16.mxu0 0
    %851 = vmatpush2.bf16.msra.mxu0 0
    %852 = vmatprep.subr.bf16.mxu0 0
    %853 = vmatpush2.bf16.msra.mxu0 0
    %854 = vmatprep.subr.bf16.mxu0 0
    %855 = vmatpush2.bf16.msra.mxu0 0
    %856 = vmatprep.subr.bf16.mxu0 0
    %857 = vmatpush2.bf16.msra.mxu0 0
    %858 = vmatprep.mubr.bf16.mxu0 0
    %859 = vmatmul.mubr.bf16.gmra.mxu0 %v824
    %v860 = vpop.f32.mrf.mxu0
    %v861 = vadd.f32 0.0, %v860
    %v862 = vpop.f32.mrf.mxu0
    %v863 = vpop.f32.mrf.mxu0
    %v864 = vadd.f32 0.0, %v863
    %v865 = vpop.f32.mrf.mxu0
    %866 = vdwg.mxu0
    %v868 = vsel %vm47, %v773, 0
    %870 = vmatprep.subr.bf16.mxu0 0
    %871 = vmatpush1.bf16.msra.mxu0 0
    %872 = vmatprep.subr.bf16.mxu0 0
    %873 = vmatpush1.bf16.msra.mxu0 0
    %874 = vmatprep.subr.bf16.mxu0 0
    %875 = vmatpush1.bf16.msra.mxu0 0
    %876 = vmatprep.subr.bf16.mxu0 0
    %877 = vmatpush1.bf16.msra.mxu0 0
    %878 = vmatprep.subr.bf16.mxu0 0
    %879 = vmatpush1.bf16.msra.mxu0 0
    %880 = vmatprep.subr.bf16.mxu0 0
    %881 = vmatpush1.bf16.msra.mxu0 0
    %882 = vmatprep.subr.bf16.mxu0 0
    %883 = vmatpush1.bf16.msra.mxu0 0
    %884 = vmatprep.subr.bf16.mxu0 0
    %885 = vmatpush1.bf16.msra.mxu0 %v688
    %886 = vmatprep.subr.bf16.mxu0 0
    %887 = vmatpush2.bf16.msra.mxu0 0
    %888 = vmatprep.subr.bf16.mxu0 0
    %889 = vmatpush2.bf16.msra.mxu0 0
    %890 = vmatprep.subr.bf16.mxu0 0
    %891 = vmatpush2.bf16.msra.mxu0 0
    %892 = vmatprep.subr.bf16.mxu0 0
    %893 = vmatpush2.bf16.msra.mxu0 0
    %894 = vmatprep.subr.bf16.mxu0 0
    %895 = vmatpush2.bf16.msra.mxu0 0
    %896 = vmatprep.subr.bf16.mxu0 0
    %897 = vmatpush2.bf16.msra.mxu0 0
    %898 = vmatprep.subr.bf16.mxu0 0
    %899 = vmatpush2.bf16.msra.mxu0 0
    %900 = vmatprep.subr.bf16.mxu0 0
    %901 = vmatpush2.bf16.msra.mxu0 0
    %902 = vmatprep.mubr.bf16.mxu0 0
    %903 = vmatmul.mubr.bf16.gmra.mxu0 %v868
    %v904 = vpop.f32.mrf.mxu0
    %v905 = vadd.f32 %v861, %v904
    %v906 = vpop.f32.mrf.mxu0
    %v907 = vpop.f32.mrf.mxu0
    %v908 = vadd.f32 %v864, %v907
    %v909 = vpop.f32.mrf.mxu0
    %910 = vdwg.mxu0
    %911 = vset.pattern.permute.xlu0 53
    %912 = vperm.xlu0 %911, %v682
    %v913 = vpop.permute.xlu0 %912
    %915 = vset.pattern.permute.xlu0 53
    %916 = vperm.xlu0 %915, %v685
    %v917 = vpop.permute.xlu0 %916
    %v919 = vlaneseq
    %v920 = vshrl.u32 %v919, 7
    %v921 = vsub.s32 2, %v920
    %v922 = vrot.slane %v713, %v921
    %v923 = vadd.f32 %v913, %v922
    %v924 = vadd.f32 %v917, %v922
    %vm925 = vcmp.gt.f32.partialorder %v923, 0.0
    %vm926 = vcmp.gt.f32.partialorder %v924, 0.0
    %v927 = vmul.f32 %v923, 0.2
    %v928 = vmul.f32 %v924, 0.2
    %v929 = vsel %vm925, %v923, %v927
    %v930 = vsel %vm926, %v924, %v928
    %v931 = vsel %vm239, %v929, -1e+09
    %v932 = vsel %vm240, %v930, -1e+09
    %v933 = vsel %vm47, %v931, -inf
    %934 = vmax.xlane.f32.xlu0 %v933
    %v935 = vpop.xlane.xlu0 %934
    %v936 = vsel %vm47, %v932, -inf
    %937 = vmax.xlane.f32.xlu0 %v936
    %v938 = vpop.xlane.xlu0 %937
    %v939 = vsub.f32 %v931, %v935
    %v940 = vsub.f32 %v932, %v938
    %v941 = vmul.f32 %v939, 1.442695
    %v942 = vpow.pop %v941
    %v943 = vmul.f32 %v940, 1.442695
    %v944 = vpow.pop %v943
    %v945 = vsel %vm47, %v942, 0.0
    %946 = vadd.xlane.f32.xlu0 %v945
    %v947 = vpop.xlane.xlu0 %946
    %v948 = vsel %vm47, %v944, 0.0
    %949 = vadd.xlane.f32.xlu0 %v948
    %v950 = vpop.xlane.xlu0 %949
    %v951 = vrcp.pop %v947
    %v952 = vrcp.pop %v950
    %v953 = vmul.f32 %v942, %v951
    %v954 = vmul.f32 %v944, %v952
    %v955 = vpack.c.bf16 %v954, %v953
    %956 = vrot.lane.b32.xlu0 %v688, 112
    %v957 = vpop.permute.xlu0 %956
    %v960 = vsel %vm47, %v955, 0
    %962 = vmatprep.subr.bf16.mxu0 0
    %963 = vmatpush1.bf16.msra.mxu0 0
    %964 = vmatprep.subr.bf16.mxu0 0
    %965 = vmatpush1.bf16.msra.mxu0 0
    %966 = vmatprep.subr.bf16.mxu0 0
    %967 = vmatpush1.bf16.msra.mxu0 0
    %968 = vmatprep.subr.bf16.mxu0 0
    %969 = vmatpush1.bf16.msra.mxu0 0
    %970 = vmatprep.subr.bf16.mxu0 0
    %971 = vmatpush1.bf16.msra.mxu0 0
    %972 = vmatprep.subr.bf16.mxu0 0
    %973 = vmatpush1.bf16.msra.mxu0 0
    %974 = vmatprep.subr.bf16.mxu0 0
    %975 = vmatpush1.bf16.msra.mxu0 0
    %976 = vmatprep.subr.bf16.mxu0 0
    %977 = vmatpush1.bf16.msra.mxu0 %v957
    %978 = vmatprep.subr.bf16.mxu0 0
    %979 = vmatpush2.bf16.msra.mxu0 0
    %980 = vmatprep.subr.bf16.mxu0 0
    %981 = vmatpush2.bf16.msra.mxu0 0
    %982 = vmatprep.subr.bf16.mxu0 0
    %983 = vmatpush2.bf16.msra.mxu0 0
    %984 = vmatprep.subr.bf16.mxu0 0
    %985 = vmatpush2.bf16.msra.mxu0 0
    %986 = vmatprep.subr.bf16.mxu0 0
    %987 = vmatpush2.bf16.msra.mxu0 0
    %988 = vmatprep.subr.bf16.mxu0 0
    %989 = vmatpush2.bf16.msra.mxu0 0
    %990 = vmatprep.subr.bf16.mxu0 0
    %991 = vmatpush2.bf16.msra.mxu0 0
    %992 = vmatprep.subr.bf16.mxu0 0
    %993 = vmatpush2.bf16.msra.mxu0 0
    %994 = vmatprep.mubr.bf16.mxu0 0
    %995 = vmatmul.mubr.bf16.gmra.mxu0 %v960
    %v996 = vpop.f32.mrf.mxu0
    %v997 = vadd.f32 0.0, %v996
    %v998 = vpop.f32.mrf.mxu0
    %v999 = vpop.f32.mrf.mxu0
    %v1000 = vadd.f32 0.0, %v999
    %v1001 = vpop.f32.mrf.mxu0
    %1002 = vdwg.mxu0
    %v1003 = vadd.f32 %v905, %v997
    %v1004 = vadd.f32 %v908, %v1000
    %v1005 = vmul.f32 %v1003, 0.33333334
    %v1006 = vmul.f32 %v1004, 0.33333334
    %v1007 = vld [vmem:[%s8] sm:$0x1]
    %v1009 = vlaneseq
    %v1010 = vshrl.u32 %v1009, 7
    %v1011 = vsub.s32 0, %v1010
    %v1012 = vrot.slane %v1007, %v1011
    %v1014 = vadd.f32 %v1005, %v1012
    %v1015 = vadd.f32 %v1006, %v1012
    %1016 = vrot.lane.b32.xlu0 %v682, 74
    %v1017 = vpop.permute.xlu0 %1016
    %1018 = vrot.lane.b32.xlu0 %v685, 74
    %v1019 = vpop.permute.xlu0 %1018
    %1022 = vxpose.xlu0.b32.start [1/16] %v1017, 128
    %1023 = vxpose.xlu0.b32.cont [2/16] %v1019, 128
    %1024 = vxpose.xlu0.b32.cont [3/16] 0.0, 128
    %1025 = vxpose.xlu0.b32.cont [4/16] 0.0, 128
    %1026 = vxpose.xlu0.b32.cont [5/16] 0.0, 128
    %1027 = vxpose.xlu0.b32.cont [6/16] 0.0, 128
    %1028 = vxpose.xlu0.b32.cont [7/16] 0.0, 128
    %1029 = vxpose.xlu0.b32.cont [8/16] 0.0, 128
    %1030 = vxpose.xlu0.b32.cont [9/16] 0.0, 128
    %1031 = vxpose.xlu0.b32.cont [10/16] 0.0, 128
    %1032 = vxpose.xlu0.b32.cont [11/16] 0.0, 128
    %1033 = vxpose.xlu0.b32.cont [12/16] 0.0, 128
    %1034 = vxpose.xlu0.b32.cont [13/16] 0.0, 128
    %1035 = vxpose.xlu0.b32.cont [14/16] 0.0, 128
    %1036 = vxpose.xlu0.b32.cont [15/16] 0.0, 128
    %1037 = vxpose.xlu0.b32.end [16/16] 0.0, 128
    %v1038 = vpop.trf.xlu0
    %v1039 = vpop.trf.xlu0
    %v1040 = vpop.trf.xlu0
    %v1041 = vpop.trf.xlu0
    %v1042 = vpop.trf.xlu0
    %v1043 = vpop.trf.xlu0
    %v1044 = vpop.trf.xlu0
    %v1045 = vpop.trf.xlu0
    %v1046 = vpop.trf.xlu0
    %v1047 = vpop.trf.xlu0
    %v1048 = vpop.trf.xlu0
    %v1049 = vpop.trf.xlu0
    %v1050 = vpop.trf.xlu0
    %v1051 = vpop.trf.xlu0
    %v1052 = vpop.trf.xlu0
    %v1053 = vpop.trf.xlu0
    %1054 = vset.pattern.permute.xlu0 57
    %1055 = vperm.xlu0 %1054, %v682
    %v1056 = vpop.permute.xlu0 %1055
    %1058 = vset.pattern.permute.xlu0 57
    %1059 = vperm.xlu0 %1058, %v685
    %v1060 = vpop.permute.xlu0 %1059
    %v1062 = vlaneseq
    %v1063 = vshrl.u32 %v1062, 7
    %v1064 = vsub.s32 0, %v1063
    %v1065 = vrot.slane %v1038, %v1064
    %v1066 = vadd.f32 %v1056, %v1065
    %v1067 = vadd.f32 %v1060, %v1065
    %vm1068 = vcmp.gt.f32.partialorder %v1066, 0.0
    %vm1069 = vcmp.gt.f32.partialorder %v1067, 0.0
    %v1070 = vmul.f32 %v1066, 0.2
    %v1071 = vmul.f32 %v1067, 0.2
    %v1072 = vsel %vm1068, %v1066, %v1070
    %v1073 = vsel %vm1069, %v1067, %v1071
    %v1074 = vsel %vm239, %v1072, -1e+09
    %v1075 = vsel %vm240, %v1073, -1e+09
    %v1076 = vsel %vm47, %v1074, -inf
    %1077 = vmax.xlane.f32.xlu0 %v1076
    %v1078 = vpop.xlane.xlu0 %1077
    %v1079 = vsel %vm47, %v1075, -inf
    %1080 = vmax.xlane.f32.xlu0 %v1079
    %v1081 = vpop.xlane.xlu0 %1080
    %v1082 = vsub.f32 %v1074, %v1078
    %v1083 = vsub.f32 %v1075, %v1081
    %v1084 = vmul.f32 %v1082, 1.442695
    %v1085 = vpow.pop %v1084
    %v1086 = vmul.f32 %v1083, 1.442695
    %v1087 = vpow.pop %v1086
    %v1088 = vsel %vm47, %v1085, 0.0
    %1089 = vadd.xlane.f32.xlu0 %v1088
    %v1090 = vpop.xlane.xlu0 %1089
    %v1091 = vsel %vm47, %v1087, 0.0
    %1092 = vadd.xlane.f32.xlu0 %v1091
    %v1093 = vpop.xlane.xlu0 %1092
    %v1094 = vrcp.pop %v1090
    %v1095 = vrcp.pop %v1093
    %v1096 = vmul.f32 %v1085, %v1094
    %v1097 = vmul.f32 %v1087, %v1095
    %v1098 = vpack.c.bf16 %v1097, %v1096
    %1099 = vset.pattern.permute.xlu0 58
    %1100 = vperm.xlu0 %1099, %v682
    %v1101 = vpop.permute.xlu0 %1100
    %1103 = vset.pattern.permute.xlu0 58
    %1104 = vperm.xlu0 %1103, %v685
    %v1105 = vpop.permute.xlu0 %1104
    %v1107 = vlaneseq
    %v1108 = vshrl.u32 %v1107, 7
    %v1109 = vsub.s32 1, %v1108
    %v1110 = vrot.slane %v1038, %v1109
    %v1111 = vadd.f32 %v1101, %v1110
    %v1112 = vadd.f32 %v1105, %v1110
    %vm1113 = vcmp.gt.f32.partialorder %v1111, 0.0
    %vm1114 = vcmp.gt.f32.partialorder %v1112, 0.0
    %v1115 = vmul.f32 %v1111, 0.2
    %v1116 = vmul.f32 %v1112, 0.2
    %v1117 = vsel %vm1113, %v1111, %v1115
    %v1118 = vsel %vm1114, %v1112, %v1116
    %v1119 = vsel %vm239, %v1117, -1e+09
    %v1120 = vsel %vm240, %v1118, -1e+09
    %v1121 = vsel %vm47, %v1119, -inf
    %1122 = vmax.xlane.f32.xlu0 %v1121
    %v1123 = vpop.xlane.xlu0 %1122
    %v1124 = vsel %vm47, %v1120, -inf
    %1125 = vmax.xlane.f32.xlu0 %v1124
    %v1126 = vpop.xlane.xlu0 %1125
    %v1127 = vsub.f32 %v1119, %v1123
    %v1128 = vsub.f32 %v1120, %v1126
    %v1129 = vmul.f32 %v1127, 1.442695
    %v1130 = vpow.pop %v1129
    %v1131 = vmul.f32 %v1128, 1.442695
    %v1132 = vpow.pop %v1131
    %v1133 = vsel %vm47, %v1130, 0.0
    %1134 = vadd.xlane.f32.xlu0 %v1133
    %v1135 = vpop.xlane.xlu0 %1134
    %v1136 = vsel %vm47, %v1132, 0.0
    %1137 = vadd.xlane.f32.xlu0 %v1136
    %v1138 = vpop.xlane.xlu0 %1137
    %v1139 = vrcp.pop %v1135
    %v1140 = vrcp.pop %v1138
    %v1141 = vmul.f32 %v1130, %v1139
    %v1142 = vmul.f32 %v1132, %v1140
    %v1143 = vpack.c.bf16 %v1142, %v1141
    %1144 = vrot.lane.b32.xlu0 %v688, 96
    %v1145 = vpop.permute.xlu0 %1144
    %v1148 = vsel %vm47, %v1143, 0
    %1150 = vmatprep.subr.bf16.mxu0 0
    %1151 = vmatpush1.bf16.msra.mxu0 0
    %1152 = vmatprep.subr.bf16.mxu0 0
    %1153 = vmatpush1.bf16.msra.mxu0 0
    %1154 = vmatprep.subr.bf16.mxu0 0
    %1155 = vmatpush1.bf16.msra.mxu0 0
    %1156 = vmatprep.subr.bf16.mxu0 0
    %1157 = vmatpush1.bf16.msra.mxu0 0
    %1158 = vmatprep.subr.bf16.mxu0 0
    %1159 = vmatpush1.bf16.msra.mxu0 0
    %1160 = vmatprep.subr.bf16.mxu0 0
    %1161 = vmatpush1.bf16.msra.mxu0 0
    %1162 = vmatprep.subr.bf16.mxu0 0
    %1163 = vmatpush1.bf16.msra.mxu0 0
    %1164 = vmatprep.subr.bf16.mxu0 0
    %1165 = vmatpush1.bf16.msra.mxu0 %v1145
    %1166 = vmatprep.subr.bf16.mxu0 0
    %1167 = vmatpush2.bf16.msra.mxu0 0
    %1168 = vmatprep.subr.bf16.mxu0 0
    %1169 = vmatpush2.bf16.msra.mxu0 0
    %1170 = vmatprep.subr.bf16.mxu0 0
    %1171 = vmatpush2.bf16.msra.mxu0 0
    %1172 = vmatprep.subr.bf16.mxu0 0
    %1173 = vmatpush2.bf16.msra.mxu0 0
    %1174 = vmatprep.subr.bf16.mxu0 0
    %1175 = vmatpush2.bf16.msra.mxu0 0
    %1176 = vmatprep.subr.bf16.mxu0 0
    %1177 = vmatpush2.bf16.msra.mxu0 0
    %1178 = vmatprep.subr.bf16.mxu0 0
    %1179 = vmatpush2.bf16.msra.mxu0 0
    %1180 = vmatprep.subr.bf16.mxu0 0
    %1181 = vmatpush2.bf16.msra.mxu0 0
    %1182 = vmatprep.mubr.bf16.mxu0 0
    %1183 = vmatmul.mubr.bf16.gmra.mxu0 %v1148
    %v1184 = vpop.f32.mrf.mxu0
    %v1185 = vadd.f32 0.0, %v1184
    %v1186 = vpop.f32.mrf.mxu0
    %v1187 = vpop.f32.mrf.mxu0
    %v1188 = vadd.f32 0.0, %v1187
    %v1189 = vpop.f32.mrf.mxu0
    %1190 = vdwg.mxu0
    %1191 = vrot.lane.b32.xlu0 %v688, 104
    %v1192 = vpop.permute.xlu0 %1191
    %v1195 = vsel %vm47, %v1098, 0
    %1197 = vmatprep.subr.bf16.mxu0 0
    %1198 = vmatpush1.bf16.msra.mxu0 0
    %1199 = vmatprep.subr.bf16.mxu0 0
    %1200 = vmatpush1.bf16.msra.mxu0 0
    %1201 = vmatprep.subr.bf16.mxu0 0
    %1202 = vmatpush1.bf16.msra.mxu0 0
    %1203 = vmatprep.subr.bf16.mxu0 0
    %1204 = vmatpush1.bf16.msra.mxu0 0
    %1205 = vmatprep.subr.bf16.mxu0 0
    %1206 = vmatpush1.bf16.msra.mxu0 0
    %1207 = vmatprep.subr.bf16.mxu0 0
    %1208 = vmatpush1.bf16.msra.mxu0 0
    %1209 = vmatprep.subr.bf16.mxu0 0
    %1210 = vmatpush1.bf16.msra.mxu0 0
    %1211 = vmatprep.subr.bf16.mxu0 0
    %1212 = vmatpush1.bf16.msra.mxu0 %v1192
    %1213 = vmatprep.subr.bf16.mxu0 0
    %1214 = vmatpush2.bf16.msra.mxu0 0
    %1215 = vmatprep.subr.bf16.mxu0 0
    %1216 = vmatpush2.bf16.msra.mxu0 0
    %1217 = vmatprep.subr.bf16.mxu0 0
    %1218 = vmatpush2.bf16.msra.mxu0 0
    %1219 = vmatprep.subr.bf16.mxu0 0
    %1220 = vmatpush2.bf16.msra.mxu0 0
    %1221 = vmatprep.subr.bf16.mxu0 0
    %1222 = vmatpush2.bf16.msra.mxu0 0
    %1223 = vmatprep.subr.bf16.mxu0 0
    %1224 = vmatpush2.bf16.msra.mxu0 0
    %1225 = vmatprep.subr.bf16.mxu0 0
    %1226 = vmatpush2.bf16.msra.mxu0 0
    %1227 = vmatprep.subr.bf16.mxu0 0
    %1228 = vmatpush2.bf16.msra.mxu0 0
    %1229 = vmatprep.mubr.bf16.mxu0 0
    %1230 = vmatmul.mubr.bf16.gmra.mxu0 %v1195
    %v1231 = vpop.f32.mrf.mxu0
    %v1232 = vadd.f32 %v1185, %v1231
    %v1233 = vpop.f32.mrf.mxu0
    %v1234 = vpop.f32.mrf.mxu0
    %v1235 = vadd.f32 %v1188, %v1234
    %v1236 = vpop.f32.mrf.mxu0
    %1237 = vdwg.mxu0
    %1238 = vset.pattern.permute.xlu0 59
    %1239 = vperm.xlu0 %1238, %v682
    %v1240 = vpop.permute.xlu0 %1239
    %1242 = vset.pattern.permute.xlu0 59
    %1243 = vperm.xlu0 %1242, %v685
    %v1244 = vpop.permute.xlu0 %1243
    %v1246 = vlaneseq
    %v1247 = vshrl.u32 %v1246, 7
    %v1248 = vsub.s32 2, %v1247
    %v1249 = vrot.slane %v1038, %v1248
    %v1250 = vadd.f32 %v1240, %v1249
    %v1251 = vadd.f32 %v1244, %v1249
    %vm1252 = vcmp.gt.f32.partialorder %v1250, 0.0
    %vm1253 = vcmp.gt.f32.partialorder %v1251, 0.0
    %v1254 = vmul.f32 %v1250, 0.2
    %v1255 = vmul.f32 %v1251, 0.2
    %v1256 = vsel %vm1252, %v1250, %v1254
    %v1257 = vsel %vm1253, %v1251, %v1255
    %v1258 = vsel %vm239, %v1256, -1e+09
    %v1259 = vsel %vm240, %v1257, -1e+09
    %v1260 = vsel %vm47, %v1258, -inf
    %1261 = vmax.xlane.f32.xlu0 %v1260
    %v1262 = vpop.xlane.xlu0 %1261
    %v1263 = vsel %vm47, %v1259, -inf
    %1264 = vmax.xlane.f32.xlu0 %v1263
    %v1265 = vpop.xlane.xlu0 %1264
    %v1266 = vsub.f32 %v1258, %v1262
    %v1267 = vsub.f32 %v1259, %v1265
    %v1268 = vmul.f32 %v1266, 1.442695
    %v1269 = vpow.pop %v1268
    %v1270 = vmul.f32 %v1267, 1.442695
    %v1271 = vpow.pop %v1270
    %v1272 = vsel %vm47, %v1269, 0.0
    %1273 = vadd.xlane.f32.xlu0 %v1272
    %v1274 = vpop.xlane.xlu0 %1273
    %v1275 = vsel %vm47, %v1271, 0.0
    %1276 = vadd.xlane.f32.xlu0 %v1275
    %v1277 = vpop.xlane.xlu0 %1276
    %v1278 = vrcp.pop %v1274
    %v1279 = vrcp.pop %v1277
    %v1280 = vmul.f32 %v1269, %v1278
    %v1281 = vmul.f32 %v1271, %v1279
    %v1282 = vpack.c.bf16 %v1281, %v1280
    %1283 = vrot.lane.b32.xlu0 %v688, 88
    %v1284 = vpop.permute.xlu0 %1283
    %v1287 = vsel %vm47, %v1282, 0
    %1289 = vmatprep.subr.bf16.mxu0 0
    %1290 = vmatpush1.bf16.msra.mxu0 0
    %1291 = vmatprep.subr.bf16.mxu0 0
    %1292 = vmatpush1.bf16.msra.mxu0 0
    %1293 = vmatprep.subr.bf16.mxu0 0
    %1294 = vmatpush1.bf16.msra.mxu0 0
    %1295 = vmatprep.subr.bf16.mxu0 0
    %1296 = vmatpush1.bf16.msra.mxu0 0
    %1297 = vmatprep.subr.bf16.mxu0 0
    %1298 = vmatpush1.bf16.msra.mxu0 0
    %1299 = vmatprep.subr.bf16.mxu0 0
    %1300 = vmatpush1.bf16.msra.mxu0 0
    %1301 = vmatprep.subr.bf16.mxu0 0
    %1302 = vmatpush1.bf16.msra.mxu0 0
    %1303 = vmatprep.subr.bf16.mxu0 0
    %1304 = vmatpush1.bf16.msra.mxu0 %v1284
    %1305 = vmatprep.subr.bf16.mxu0 0
    %1306 = vmatpush2.bf16.msra.mxu0 0
    %1307 = vmatprep.subr.bf16.mxu0 0
    %1308 = vmatpush2.bf16.msra.mxu0 0
    %1309 = vmatprep.subr.bf16.mxu0 0
    %1310 = vmatpush2.bf16.msra.mxu0 0
    %1311 = vmatprep.subr.bf16.mxu0 0
    %1312 = vmatpush2.bf16.msra.mxu0 0
    %1313 = vmatprep.subr.bf16.mxu0 0
    %1314 = vmatpush2.bf16.msra.mxu0 0
    %1315 = vmatprep.subr.bf16.mxu0 0
    %1316 = vmatpush2.bf16.msra.mxu0 0
    %1317 = vmatprep.subr.bf16.mxu0 0
    %1318 = vmatpush2.bf16.msra.mxu0 0
    %1319 = vmatprep.subr.bf16.mxu0 0
    %1320 = vmatpush2.bf16.msra.mxu0 0
    %1321 = vmatprep.mubr.bf16.mxu0 0
    %1322 = vmatmul.mubr.bf16.gmra.mxu0 %v1287
    %v1323 = vpop.f32.mrf.mxu0
    %v1324 = vadd.f32 0.0, %v1323
    %v1325 = vpop.f32.mrf.mxu0
    %v1326 = vpop.f32.mrf.mxu0
    %v1327 = vadd.f32 0.0, %v1326
    %v1328 = vpop.f32.mrf.mxu0
    %1329 = vdwg.mxu0
    %v1330 = vadd.f32 %v1232, %v1324
    %v1331 = vadd.f32 %v1235, %v1327
    %v1332 = vmul.f32 %v1330, 0.33333334
    %v1333 = vmul.f32 %v1331, 0.33333334
    %1334 = vrot.lane.b32.xlu0 %v1012, 120
    %v1335 = vpop.permute.xlu0 %1334
    %v1337 = vadd.f32 %v1332, %v1335
    %v1338 = vadd.f32 %v1333, %v1335
    %v1339 = vmax.f32 %v631, %v1014
    %v1340 = vmax.f32 %v632, %v1015
    %v1341 = vpack.c.bf16 %v1340, %v1339
    %v1343 = vsel %vm60, %v1341, 0
    %1345 = vmatprep.subr.bf16.mxu0 0
    %1346 = vmatpush1.bf16.xpose.msra.mxu0 0
    %1347 = vmatprep.subr.bf16.mxu0 0
    %1348 = vmatpush1.bf16.xpose.msra.mxu0 0
    %1349 = vmatprep.subr.bf16.mxu0 0
    %1350 = vmatpush1.bf16.xpose.msra.mxu0 0
    %1351 = vmatprep.subr.bf16.mxu0 0
    %1352 = vmatpush1.bf16.xpose.msra.mxu0 0
    %1353 = vmatprep.subr.bf16.mxu0 0
    %1354 = vmatpush1.bf16.xpose.msra.mxu0 0
    %1355 = vmatprep.subr.bf16.mxu0 0
    %1356 = vmatpush1.bf16.xpose.msra.mxu0 0
    %1357 = vmatprep.subr.bf16.mxu0 0
    %1358 = vmatpush1.bf16.xpose.msra.mxu0 0
    %1359 = vmatprep.subr.bf16.mxu0 0
    %1360 = vmatpush1.bf16.xpose.msra.mxu0 %v1343
    %1361 = vmatprep.subr.bf16.mxu0 0
    %1362 = vmatpush2.bf16.xpose.msra.mxu0 0
    %1363 = vmatprep.subr.bf16.mxu0 0
    %1364 = vmatpush2.bf16.xpose.msra.mxu0 0
    %1365 = vmatprep.subr.bf16.mxu0 0
    %1366 = vmatpush2.bf16.xpose.msra.mxu0 0
    %1367 = vmatprep.subr.bf16.mxu0 0
    %1368 = vmatpush2.bf16.xpose.msra.mxu0 0
    %1369 = vmatprep.subr.bf16.mxu0 0
    %1370 = vmatpush2.bf16.xpose.msra.mxu0 0
    %1371 = vmatprep.subr.bf16.mxu0 0
    %1372 = vmatpush2.bf16.xpose.msra.mxu0 0
    %1373 = vmatprep.subr.bf16.mxu0 0
    %1374 = vmatpush2.bf16.xpose.msra.mxu0 0
    %1375 = vmatprep.subr.bf16.mxu0 0
    %1376 = vmatpush2.bf16.xpose.msra.mxu0 0
    %1377 = vmatprep.mubr.bf16.mxu0 0
    %1378 = vmatmul.mubr.bf16.gmra.mxu0 %v1343
    %v1379 = vpop.f32.mrf.mxu0
    %v1380 = vadd.f32 0.0, %v1379
    %v1381 = vpop.f32.mrf.mxu0
    %v1382 = vpop.f32.mrf.mxu0
    %v1383 = vadd.f32 0.0, %v1382
    %v1384 = vpop.f32.mrf.mxu0
    %1385 = vdwg.mxu0
    %v1386 = vxor.u32 %v1380, 2147483648
    %v1387 = vxor.u32 %v1383, 2147483648
    %v1388 = vmul.f32 %v1386, 1.442695
    %v1389 = vpow.pop %v1388
    %v1390 = vmul.f32 %v1387, 1.442695
    %v1391 = vpow.pop %v1390
    %v1392 = vadd.f32 %v1389, 1.0
    %v1393 = vadd.f32 %v1391, 1.0
    %v1394 = vrcp.pop %v1392
    %v1395 = vmul.f32 1.0, %v1394
    %v1396 = vrcp.pop %v1393
    %v1397 = vmul.f32 1.0, %v1396
    %1398 = vst.msk [vmem:[#allocation2] sm:$0xff] %vm47, %v1395
    %1399 = vst.msk [vmem:[#allocation2 + $0x8] sm:$0xff] %vm47, %v1397
    %1402 = vrot.lane.b32.xlu0 %v1337, 8
    %v1403 = vpop.permute.xlu0 %1402
    %1404 = vrot.lane.b32.xlu0 %v1338, 8
    %v1405 = vpop.permute.xlu0 %1404
    %v1408 = vmax.f32 %v631, %v1403
    %v1409 = vmax.f32 %v632, %v1405
    %v1410 = vsel %vm60, %v1339, %v1408
    %v1411 = vsel %vm60, %v1340, %v1409
    %1412 = vst.msk [vmem:[%s10] sm:$0xff] %vm47, %v1410
    %1413 = vst.msk [vmem:[%s10 + $0x8] sm:$0xff] %vm47, %v1411
    // Predicated region
    $region38: #{gcn_gat_vgae_forward.1} parent=1 // pred_check
      _
    $region39: #{gcn_gat_vgae_forward.1} parent=1 // pred_check_branch
      %1415 = sbr.rel (0) target = $region41
    $region40: #{gcn_gat_vgae_forward.1} parent=1 // pred_region
      %s1417 = ssub.s32 256, 256
      %1418 = vsyncadd [#allocation3], %s1417
      %s1419 = sshll.u32 [#allocation2], 4
      %s1420 = int_to_ptr.vmem [resolvable:$true] %s1419
      %1425 = dma.vmem_to_hbm [thread:$0]  %s1420, 256, %s9, [#allocation3], 128, 128, 8
    $region41: #{gcn_gat_vgae_forward.1} parent=1 // pred_fallthru
      _
    // Predicated region
    $region42: #{gcn_gat_vgae_forward.1} parent=1 // pred_check
      _
    $region43: #{gcn_gat_vgae_forward.1} parent=1 // pred_check_branch
      %1427 = sbr.rel (0) target = $region45
    $region44: #{gcn_gat_vgae_forward.1} parent=1 // pred_region
      _
    $region45: #{gcn_gat_vgae_forward.1} parent=1 // pred_fallthru
      _
    // Predicated region
    $region46: #{gcn_gat_vgae_forward.1} parent=1 // pred_check
      _
    $region47: #{gcn_gat_vgae_forward.1} parent=1 // pred_check_branch
      %1429 = sbr.rel (0) target = $region49
    $region48: #{gcn_gat_vgae_forward.1} parent=1 // pred_region
      %1430 = dma.done [#allocation3], 256
    $region49: #{gcn_gat_vgae_forward.1} parent=1 // pred_fallthru
      _
    // Predicated region
    $region50: #{gcn_gat_vgae_forward.1} parent=1 // pred_check
      _
    $region51: #{gcn_gat_vgae_forward.1} parent=1 // pred_check_branch
      %1432 = sbr.rel (0) target = $region53
    $region52: #{gcn_gat_vgae_forward.1} parent=1 // pred_region
      _
    $region53: #{gcn_gat_vgae_forward.1} parent=1 // pred_fallthru
      _
    %1433 = vsyncpa [#allocation3], 1

</llo_original>
